<compile_context>
chip_gen: v7x
topology: tpu7x:2x2x1
jax: 0.10.0
libtpu: 0.0.40
codegen_flags: <defaults>
</compile_context>

<pallas_src>
import jax
import jax.numpy as jnp
from jax.experimental import pallas as pl
from jax.experimental.pallas import tpu as pltpu

# ----------------------------- problem sizes --------------------------------
B = 2               # batch
C = 4               # input channels
H = W = 16          # spatial
BACKBONE_DIM = 256  # synthetic BaseBackbone.output_dim
FEATURE_DIM = 512   # TransferNetwork feature_dim (default 512)
OUTPUT_DIM = 10     # number of classes

HW = H * W          # 256 spatial positions per image
M = B * HW          # 512 im2col rows
K_RAW = 9 * C       # 36  im2col contraction dim
K_PAD = 128         # lane-aligned contraction dim
B_PAD = 8           # batch padded to a full sublane group
OUT_PAD = 128       # lane-dense classifier output width


# ------------------------------- kernel --------------------------------------
def transfer_kernel(patches_ref, wconv_ref, bconv_ref, pool_ref,
                    w1_ref, b1_ref, w2_ref, b2_ref, out_ref):
    """Fused forward: conv(im2col matmul)+ReLU -> GAP -> Linear -> ReLU -> Linear."""
    # --- backbone: Conv2d(C, BACKBONE_DIM, 3, padding=1) as one MXU matmul ---
    conv = jnp.dot(patches_ref[...], wconv_ref[...],
                   preferred_element_type=jnp.float32)          # (M, BD) f32
    conv = conv + bconv_ref[...]                                # (1, BD) bias
    conv = jnp.maximum(conv, 0.0)                               # ReLU (f32 VPU)

    # --- global average pool as a pooling matmul -----------------------------
    # pool row b holds 1/HW over image b's M-rows -> feats[b] = mean over HW.
    feats = jnp.dot(pool_ref[...], conv.astype(pool_ref.dtype),
                    preferred_element_type=jnp.float32)          # (B_PAD, BD)

    # --- classifier head ------------------------------------------------------
    # Dropout layers are identity in eval mode: intentionally no PRNG/masking.
    h = jnp.dot(feats.astype(w1_ref.dtype), w1_ref[...],
                preferred_element_type=jnp.float32) + b1_ref[...]
    h = jnp.maximum(h, 0.0)                                      # ReLU (f32 VPU)
    logits = jnp.dot(h.astype(w2_ref.dtype), w2_ref[...],
                     preferred_element_type=jnp.float32) + b2_ref[...]

    out_ref[...] = logits.astype(out_ref.dtype)                  # (B_PAD, OUT_PAD)


# ------------------------------- wrapper --------------------------------------
def _im2col_3x3_same(x_nhwc):
    """3x3, stride 1, padding 1 im2col. Returns (B*H*W, 9*C), (dh, dw, c) order."""
    b, h, w, c = x_nhwc.shape
    xp = jnp.pad(x_nhwc, ((0, 0), (1, 1), (1, 1), (0, 0)))
    cols = []
    for dh in range(3):
        for dw in range(3):
            cols.append(xp[:, dh:dh + h, dw:dw + w, :])          # (B, H, W, C)
    patches = jnp.concatenate(cols, axis=-1)                     # (B, H, W, 9C)
    return patches.reshape(b * h * w, 9 * c)


@jax.jit
def transfer_forward(x_nchw, w_conv, b_conv, w1, b1, w2, b2):
    """TransferNetwork forward pass. Returns logits of shape (B, OUTPUT_DIM)."""
    f32, bf16 = jnp.float32, jnp.bfloat16

    # ---- wrapper-side layout plumbing (hoisted out of the kernel) -----------
    x_nhwc = jnp.transpose(x_nchw, (0, 2, 3, 1)).astype(f32)     # NCHW -> NHWC
    patches = _im2col_3x3_same(x_nhwc)                           # (M, 36)
    patches = jnp.pad(patches, ((0, 0), (0, K_PAD - K_RAW)))     # (M, 128)

    # conv weight (BD, C, 3, 3) -> (9*C, BD) in (dh, dw, c) row order to match
    # the patch column order; zero-pad rows up to K_PAD.
    w_conv_mat = jnp.transpose(w_conv, (2, 3, 1, 0)).reshape(K_RAW, BACKBONE_DIM)
    w_conv_mat = jnp.pad(w_conv_mat, ((0, K_PAD - K_RAW), (0, 0)))

    # pooling matrix (B_PAD, M): row b has 1/HW over image b's positions.
    row_ids = jax.lax.broadcasted_iota(jnp.int32, (B_PAD, M), 0)
    col_ids = jax.lax.broadcasted_iota(jnp.int32, (B_PAD, M), 1)
    pool = jnp.where((row_ids < B)
                     & (col_ids >= row_ids * HW)
                     & (col_ids < (row_ids + 1) * HW),
                     1.0 / HW, 0.0).astype(f32)

    # classifier output padded lane-dense to OUT_PAD.
    w2_pad = jnp.pad(w2, ((0, 0), (0, OUT_PAD - OUTPUT_DIM)))
    b2_pad = jnp.pad(b2, ((0, OUT_PAD - OUTPUT_DIM),))

    operands = (
        patches.astype(bf16),                          # (M, K_PAD)       bf16
        w_conv_mat.astype(bf16),                       # (K_PAD, BD)      bf16
        b_conv.reshape(1, BACKBONE_DIM).astype(f32),   # (1, BD)          f32
        pool.astype(bf16),                             # (B_PAD, M)       bf16
        w1.astype(bf16),                               # (BD, FD)         bf16
        b1.reshape(1, FEATURE_DIM).astype(f32),        # (1, FD)          f32
        w2_pad.astype(bf16),                           # (FD, OUT_PAD)    bf16
        b2_pad.reshape(1, OUT_PAD).astype(f32),        # (1, OUT_PAD)     f32
    )

    def full_spec(shape):
        return pl.BlockSpec(shape, lambda i, _s=shape: (0,) * len(_s))

    in_specs = [full_spec(op.shape) for op in operands]

    logits_pad = pl.pallas_call(
        transfer_kernel,
        out_shape=jax.ShapeDtypeStruct((B_PAD, OUT_PAD), f32),
        grid_spec=pltpu.PrefetchScalarGridSpec(
            num_scalar_prefetch=0,
            grid=(1,),
            in_specs=in_specs,
            out_specs=pl.BlockSpec((B_PAD, OUT_PAD), lambda i: (0, 0)),
        ),
        compiler_params=pltpu.CompilerParams(
            dimension_semantics=("arbitrary",)),
    )(*operands)

    return logits_pad[:B, :OUTPUT_DIM]


# --------------------------- pure-JAX reference -------------------------------
def reference_forward(x_nchw, w_conv, b_conv, w1, b1, w2, b2):
    out = jax.lax.conv_general_dilated(
        x_nchw, w_conv, window_strides=(1, 1), padding=((1, 1), (1, 1)),
        dimension_numbers=("NCHW", "OIHW", "NCHW"))
    out = out + b_conv[None, :, None, None]
    out = jnp.maximum(out, 0.0)
    feats = jnp.mean(out, axis=(2, 3))                 # global average pool
    h = jnp.maximum(feats @ w1 + b1, 0.0)              # Dropout = identity (eval)
    return h @ w2 + b2


# ---------------------------------- main --------------------------------------
if __name__ == "__main__":
    key = jax.random.PRNGKey(0)
    kx, kc, kbc, k1, kb1, k2, kb2 = jax.random.split(key, 7)

    x = jax.random.normal(kx, (B, C, H, W), jnp.float32)
    w_conv = jax.random.normal(kc, (BACKBONE_DIM, C, 3, 3), jnp.float32) / (K_RAW ** 0.5)
    b_conv = jax.random.normal(kbc, (BACKBONE_DIM,), jnp.float32) * 0.1
    w1 = jax.random.normal(k1, (BACKBONE_DIM, FEATURE_DIM), jnp.float32) / (BACKBONE_DIM ** 0.5)
    b1 = jax.random.normal(kb1, (FEATURE_DIM,), jnp.float32) * 0.1
    w2 = jax.random.normal(k2, (FEATURE_DIM, OUTPUT_DIM), jnp.float32) / (FEATURE_DIM ** 0.5)
    b2 = jax.random.normal(kb2, (OUTPUT_DIM,), jnp.float32) * 0.1

    logits = jax.block_until_ready(
        transfer_forward(x, w_conv, b_conv, w1, b1, w2, b2))
    assert logits.shape == (B, OUTPUT_DIM), logits.shape

    ref = reference_forward(x, w_conv, b_conv, w1, b1, w2, b2)
    max_err = float(jnp.max(jnp.abs(logits - ref)))
    # bf16 MXU operands with f32 accumulation -> small drift vs f32 reference.
    if max_err > 0.1:
        raise AssertionError(f"mismatch vs reference: max |diff| = {max_err}")

    print("KERNEL_OK")
</pallas_src>

<mosaic_0001>
module attributes {stable_mosaic.version = 11 : i64} {
  func.func @transfer_kernel(%arg0: i32, %arg1: memref<512x128xbf16, #tpu.memory_space<vmem>>, %arg2: memref<128x256xbf16, #tpu.memory_space<vmem>>, %arg3: memref<1x256xf32, #tpu.memory_space<vmem>>, %arg4: memref<8x512xbf16, #tpu.memory_space<vmem>>, %arg5: memref<256x512xbf16, #tpu.memory_space<vmem>>, %arg6: memref<1x512xf32, #tpu.memory_space<vmem>>, %arg7: memref<512x128xbf16, #tpu.memory_space<vmem>>, %arg8: memref<1x128xf32, #tpu.memory_space<vmem>>, %arg9: memref<8x128xf32, #tpu.memory_space<vmem>>) attributes {dimension_semantics = [#tpu.dimension_semantics<arbitrary>], iteration_bounds = array<i64: 1>, scalar_prefetch = 0 : i64, scratch_operands = 0 : i64, tpu.core_type = #tpu.core_type<tc>, window_params = [{pipeline_mode = #tpu.pipeline_mode<synchronous>, transform_indices = @transform_0, window_bounds = array<i64: 512, 128>}, {pipeline_mode = #tpu.pipeline_mode<synchronous>, transform_indices = @transform_1, window_bounds = array<i64: 128, 256>}, {pipeline_mode = #tpu.pipeline_mode<synchronous>, transform_indices = @transform_2, window_bounds = array<i64: 1, 256>}, {pipeline_mode = #tpu.pipeline_mode<synchronous>, transform_indices = @transform_3, window_bounds = array<i64: 8, 512>}, {pipeline_mode = #tpu.pipeline_mode<synchronous>, transform_indices = @transform_4, window_bounds = array<i64: 256, 512>}, {pipeline_mode = #tpu.pipeline_mode<synchronous>, transform_indices = @transform_5, window_bounds = array<i64: 1, 512>}, {pipeline_mode = #tpu.pipeline_mode<synchronous>, transform_indices = @transform_6, window_bounds = array<i64: 512, 128>}, {pipeline_mode = #tpu.pipeline_mode<synchronous>, transform_indices = @transform_7, window_bounds = array<i64: 1, 128>}, {pipeline_mode = #tpu.pipeline_mode<synchronous>, transform_indices = @transform_8, window_bounds = array<i64: 8, 128>}]} {
    %c0 = arith.constant 0 : index
    %c0_0 = arith.constant 0 : index
    %0 = vector.load %arg1[%c0, %c0_0] : memref<512x128xbf16, #tpu.memory_space<vmem>>, vector<512x128xbf16>
    %c0_1 = arith.constant 0 : index
    %c0_2 = arith.constant 0 : index
    %1 = vector.load %arg2[%c0_1, %c0_2] : memref<128x256xbf16, #tpu.memory_space<vmem>>, vector<128x256xbf16>
    %cst = arith.constant dense<0.000000e+00> : vector<512x256xf32>
    %2 = tpu.matmul %0, %1, %cst {dimension_numbers = #tpu.dot_dimension_numbers<[1], [0], [0], [1], [0, 0, 1, 1], [], []>} : vector<512x128xbf16>, vector<128x256xbf16>, vector<512x256xf32> -> vector<512x256xf32>
    %c0_3 = arith.constant 0 : index
    %c0_4 = arith.constant 0 : index
    %3 = vector.load %arg3[%c0_3, %c0_4] : memref<1x256xf32, #tpu.memory_space<vmem>>, vector<1x256xf32>
    %4 = vector.broadcast %3 : vector<1x256xf32> to vector<512x256xf32>
    %5 = arith.addf %2, %4 : vector<512x256xf32>
    %cst_5 = arith.constant 0.000000e+00 : f32
    %6 = vector.broadcast %cst_5 : f32 to vector<512x256xf32>
    %7 = arith.maximumf %5, %6 : vector<512x256xf32>
    %c0_6 = arith.constant 0 : index
    %c0_7 = arith.constant 0 : index
    %8 = vector.load %arg4[%c0_6, %c0_7] : memref<8x512xbf16, #tpu.memory_space<vmem>>, vector<8x512xbf16>
    %9 = arith.truncf %7 : vector<512x256xf32> to vector<512x256xbf16>
    %cst_8 = arith.constant dense<0.000000e+00> : vector<8x256xf32>
    %10 = tpu.matmul %8, %9, %cst_8 {dimension_numbers = #tpu.dot_dimension_numbers<[1], [0], [0], [1], [0, 0, 1, 1], [], []>} : vector<8x512xbf16>, vector<512x256xbf16>, vector<8x256xf32> -> vector<8x256xf32>
    %11 = arith.truncf %10 : vector<8x256xf32> to vector<8x256xbf16>
    %c0_9 = arith.constant 0 : index
    %c0_10 = arith.constant 0 : index
    %12 = vector.load %arg5[%c0_9, %c0_10] : memref<256x512xbf16, #tpu.memory_space<vmem>>, vector<256x512xbf16>
    %cst_11 = arith.constant dense<0.000000e+00> : vector<8x512xf32>
    %13 = tpu.matmul %11, %12, %cst_11 {dimension_numbers = #tpu.dot_dimension_numbers<[1], [0], [0], [1], [0, 0, 1, 1], [], []>} : vector<8x256xbf16>, vector<256x512xbf16>, vector<8x512xf32> -> vector<8x512xf32>
    %c0_12 = arith.constant 0 : index
    %c0_13 = arith.constant 0 : index
    %14 = vector.load %arg6[%c0_12, %c0_13] : memref<1x512xf32, #tpu.memory_space<vmem>>, vector<1x512xf32>
    %15 = vector.broadcast %14 : vector<1x512xf32> to vector<8x512xf32>
    %16 = arith.addf %13, %15 : vector<8x512xf32>
    %cst_14 = arith.constant 0.000000e+00 : f32
    %17 = vector.broadcast %cst_14 : f32 to vector<8x512xf32>
    %18 = arith.maximumf %16, %17 : vector<8x512xf32>
    %19 = arith.truncf %18 : vector<8x512xf32> to vector<8x512xbf16>
    %c0_15 = arith.constant 0 : index
    %c0_16 = arith.constant 0 : index
    %20 = vector.load %arg7[%c0_15, %c0_16] : memref<512x128xbf16, #tpu.memory_space<vmem>>, vector<512x128xbf16>
    %cst_17 = arith.constant dense<0.000000e+00> : vector<8x128xf32>
    %21 = tpu.matmul %19, %20, %cst_17 {dimension_numbers = #tpu.dot_dimension_numbers<[1], [0], [0], [1], [0, 0, 1, 1], [], []>} : vector<8x512xbf16>, vector<512x128xbf16>, vector<8x128xf32> -> vector<8x128xf32>
    %c0_18 = arith.constant 0 : index
    %c0_19 = arith.constant 0 : index
    %22 = vector.load %arg8[%c0_18, %c0_19] : memref<1x128xf32, #tpu.memory_space<vmem>>, vector<1x128xf32>
    %23 = vector.broadcast %22 : vector<1x128xf32> to vector<8x128xf32>
    %24 = arith.addf %21, %23 : vector<8x128xf32>
    %c0_20 = arith.constant 0 : index
    %c0_21 = arith.constant 0 : index
    %25 = vector.load %arg9[%c0_20, %c0_21] : memref<8x128xf32, #tpu.memory_space<vmem>>, vector<8x128xf32>
    tpu.vector_store %arg9[%c0_20, %c0_21], %24 {strides = array<i32>} : memref<8x128xf32, #tpu.memory_space<vmem>>, vector<8x128xf32>,
    return
  }
  func.func @transform_0(%arg0: i32) -> (i32, i32) {
    %c0_i32 = arith.constant 0 : i32
    %c0_i32_0 = arith.constant 0 : i32
    %c0_i32_1 = arith.constant 0 : i32
    return %c0_i32, %c0_i32_0 : i32, i32
  }
  func.func @transform_1(%arg0: i32) -> (i32, i32) {
    %c0_i32 = arith.constant 0 : i32
    %c0_i32_0 = arith.constant 0 : i32
    %c0_i32_1 = arith.constant 0 : i32
    return %c0_i32, %c0_i32_0 : i32, i32
  }
  func.func @transform_2(%arg0: i32) -> (i32, i32) {
    %c0_i32 = arith.constant 0 : i32
    %c0_i32_0 = arith.constant 0 : i32
    %c0_i32_1 = arith.constant 0 : i32
    return %c0_i32, %c0_i32_0 : i32, i32
  }
  func.func @transform_3(%arg0: i32) -> (i32, i32) {
    %c0_i32 = arith.constant 0 : i32
    %c0_i32_0 = arith.constant 0 : i32
    %c0_i32_1 = arith.constant 0 : i32
    return %c0_i32, %c0_i32_0 : i32, i32
  }
  func.func @transform_4(%arg0: i32) -> (i32, i32) {
    %c0_i32 = arith.constant 0 : i32
    %c0_i32_0 = arith.constant 0 : i32
    %c0_i32_1 = arith.constant 0 : i32
    return %c0_i32, %c0_i32_0 : i32, i32
  }
  func.func @transform_5(%arg0: i32) -> (i32, i32) {
    %c0_i32 = arith.constant 0 : i32
    %c0_i32_0 = arith.constant 0 : i32
    %c0_i32_1 = arith.constant 0 : i32
    return %c0_i32, %c0_i32_0 : i32, i32
  }
  func.func @transform_6(%arg0: i32) -> (i32, i32) {
    %c0_i32 = arith.constant 0 : i32
    %c0_i32_0 = arith.constant 0 : i32
    %c0_i32_1 = arith.constant 0 : i32
    return %c0_i32, %c0_i32_0 : i32, i32
  }
  func.func @transform_7(%arg0: i32) -> (i32, i32) {
    %c0_i32 = arith.constant 0 : i32
    %c0_i32_0 = arith.constant 0 : i32
    %c0_i32_1 = arith.constant 0 : i32
    return %c0_i32, %c0_i32_0 : i32, i32
  }
  func.func @transform_8(%arg0: i32) -> (i32, i32) {
    %c0_i32 = arith.constant 0 : i32
    %c0_i32_0 = arith.constant 0 : i32
    %c0_i32_1 = arith.constant 0 : i32
    return %c0_i32, %c0_i32_0 : i32, i32
  }
}

</mosaic_0001>

<llo_original>
// kernel: transfer_forward.1
$region0: #{transfer_forward.1}
  #allocation0 [shape = 'u32[]', space=smem, size = 0x4, offset = 0x4, fixed_abs, tag = 'smem constant byte address 0x4 - core index']
  #allocation1 [shape = 'u32[144,128]{1,0:T(1,128)}', space=vmem, size = 0x12000, scoped, tag = 'internal scratch']
  %s0 = inlined_call_operand.vmem [shape: bf16[512,128], index: 0, kind: input, shape index: {}]
  %s1 = inlined_call_operand.vmem [shape: bf16[128,256], index: 1, kind: input, shape index: {}]
  %s2 = inlined_call_operand.vmem [shape: f32[1,256], index: 2, kind: input, shape index: {}]
  %s3 = inlined_call_operand.vmem [shape: bf16[8,512], index: 3, kind: input, shape index: {}]
  %s4 = inlined_call_operand.vmem [shape: bf16[256,512], index: 4, kind: input, shape index: {}]
  %s5 = inlined_call_operand.vmem [shape: f32[1,512], index: 5, kind: input, shape index: {}]
  %s6 = inlined_call_operand.vmem [shape: bf16[512,128], index: 6, kind: input, shape index: {}]
  %s7 = inlined_call_operand.vmem [shape: f32[1,128], index: 7, kind: input, shape index: {}]
  %s8 = inlined_call_operand.vmem [shape: f32[8,128], index: 8, kind: output, shape index: {}]
  %s9 = sld [smem:[#allocation0]]
  $region42: #{transfer_forward.1} parent=0
    _
  %s11 = ssub.s32 1, %s9
  %s12 = scalar_select 0, %s11, %s9
  // Predicated region
  $region2: #{transfer_forward.1} parent=0 // pred_check
    _
  $region3: #{transfer_forward.1} parent=0 // pred_check_branch
    %14 = sbr.rel (0) target = $region5
  $region4: #{transfer_forward.1} parent=0 // pred_region
    _
  $region5: #{transfer_forward.1} parent=0 // pred_fallthru
    _
  // Predicated region
  $region6: #{transfer_forward.1} parent=0 // pred_check
    _
  $region7: #{transfer_forward.1} parent=0 // pred_check_branch
    %16 = sbr.rel (0) target = $region9
  $region8: #{transfer_forward.1} parent=0 // pred_region
    _
  $region9: #{transfer_forward.1} parent=0 // pred_fallthru
    _
  // Predicated region
  $region10: #{transfer_forward.1} parent=0 // pred_check
    _
  $region11: #{transfer_forward.1} parent=0 // pred_check_branch
    %18 = sbr.rel (0) target = $region13
  $region12: #{transfer_forward.1} parent=0 // pred_region
    _
  $region13: #{transfer_forward.1} parent=0 // pred_fallthru
    _
  // Predicated region
  $region14: #{transfer_forward.1} parent=0 // pred_check
    _
  $region15: #{transfer_forward.1} parent=0 // pred_check_branch
    %20 = sbr.rel (0) target = $region17
  $region16: #{transfer_forward.1} parent=0 // pred_region
    _
  $region17: #{transfer_forward.1} parent=0 // pred_fallthru
    _
  // Predicated region
  $region18: #{transfer_forward.1} parent=0 // pred_check
    _
  $region19: #{transfer_forward.1} parent=0 // pred_check_branch
    %22 = sbr.rel (0) target = $region21
  $region20: #{transfer_forward.1} parent=0 // pred_region
    _
  $region21: #{transfer_forward.1} parent=0 // pred_fallthru
    _
  // Predicated region
  $region22: #{transfer_forward.1} parent=0 // pred_check
    _
  $region23: #{transfer_forward.1} parent=0 // pred_check_branch
    %24 = sbr.rel (0) target = $region25
  $region24: #{transfer_forward.1} parent=0 // pred_region
    _
  $region25: #{transfer_forward.1} parent=0 // pred_fallthru
    _
  // Predicated region
  $region26: #{transfer_forward.1} parent=0 // pred_check
    _
  $region27: #{transfer_forward.1} parent=0 // pred_check_branch
    %26 = sbr.rel (0) target = $region29
  $region28: #{transfer_forward.1} parent=0 // pred_region
    _
  $region29: #{transfer_forward.1} parent=0 // pred_fallthru
    _
  // Predicated region
  $region30: #{transfer_forward.1} parent=0 // pred_check
    _
  $region31: #{transfer_forward.1} parent=0 // pred_check_branch
    %28 = sbr.rel (0) target = $region33
  $region32: #{transfer_forward.1} parent=0 // pred_region
    _
  $region33: #{transfer_forward.1} parent=0 // pred_fallthru
    _
  %v30 = vld [vmem:[%s0] sm:$0xf]
  %v31 = vld [vmem:[%s0 + $0x4] sm:$0xf]
  %v32 = vld [vmem:[%s0 + $0x8] sm:$0xf]
  %v33 = vld [vmem:[%s0 + $0xc] sm:$0xf]
  %v34 = vld [vmem:[%s0 + $0x10] sm:$0xf]
  %v35 = vld [vmem:[%s0 + $0x14] sm:$0xf]
  %v36 = vld [vmem:[%s0 + $0x18] sm:$0xf]
  %v37 = vld [vmem:[%s0 + $0x1c] sm:$0xf]
  %v38 = vld [vmem:[%s0 + $0x20] sm:$0xf]
  %v39 = vld [vmem:[%s0 + $0x24] sm:$0xf]
  %v40 = vld [vmem:[%s0 + $0x28] sm:$0xf]
  %v41 = vld [vmem:[%s0 + $0x2c] sm:$0xf]
  %v42 = vld [vmem:[%s0 + $0x30] sm:$0xf]
  %v43 = vld [vmem:[%s0 + $0x34] sm:$0xf]
  %v44 = vld [vmem:[%s0 + $0x38] sm:$0xf]
  %v45 = vld [vmem:[%s0 + $0x3c] sm:$0xf]
  %v46 = vld [vmem:[%s0 + $0x40] sm:$0xf]
  %v47 = vld [vmem:[%s0 + $0x44] sm:$0xf]
  %v48 = vld [vmem:[%s0 + $0x48] sm:$0xf]
  %v49 = vld [vmem:[%s0 + $0x4c] sm:$0xf]
  %v50 = vld [vmem:[%s0 + $0x50] sm:$0xf]
  %v51 = vld [vmem:[%s0 + $0x54] sm:$0xf]
  %v52 = vld [vmem:[%s0 + $0x58] sm:$0xf]
  %v53 = vld [vmem:[%s0 + $0x5c] sm:$0xf]
  %v54 = vld [vmem:[%s0 + $0x60] sm:$0xf]
  %v55 = vld [vmem:[%s0 + $0x64] sm:$0xf]
  %v56 = vld [vmem:[%s0 + $0x68] sm:$0xf]
  %v57 = vld [vmem:[%s0 + $0x6c] sm:$0xf]
  %v58 = vld [vmem:[%s0 + $0x70] sm:$0xf]
  %v59 = vld [vmem:[%s0 + $0x74] sm:$0xf]
  %v60 = vld [vmem:[%s0 + $0x78] sm:$0xf]
  %v61 = vld [vmem:[%s0 + $0x7c] sm:$0xf]
  %v62 = vld [vmem:[%s0 + $0x80] sm:$0xf]
  %v63 = vld [vmem:[%s0 + $0x84] sm:$0xf]
  %v64 = vld [vmem:[%s0 + $0x88] sm:$0xf]
  %v65 = vld [vmem:[%s0 + $0x8c] sm:$0xf]
  %v66 = vld [vmem:[%s0 + $0x90] sm:$0xf]
  %v67 = vld [vmem:[%s0 + $0x94] sm:$0xf]
  %v68 = vld [vmem:[%s0 + $0x98] sm:$0xf]
  %v69 = vld [vmem:[%s0 + $0x9c] sm:$0xf]
  %v70 = vld [vmem:[%s0 + $0xa0] sm:$0xf]
  %v71 = vld [vmem:[%s0 + $0xa4] sm:$0xf]
  %v72 = vld [vmem:[%s0 + $0xa8] sm:$0xf]
  %v73 = vld [vmem:[%s0 + $0xac] sm:$0xf]
  %v74 = vld [vmem:[%s0 + $0xb0] sm:$0xf]
  %v75 = vld [vmem:[%s0 + $0xb4] sm:$0xf]
  %v76 = vld [vmem:[%s0 + $0xb8] sm:$0xf]
  %v77 = vld [vmem:[%s0 + $0xbc] sm:$0xf]
  %v78 = vld [vmem:[%s0 + $0xc0] sm:$0xf]
  %v79 = vld [vmem:[%s0 + $0xc4] sm:$0xf]
  %v80 = vld [vmem:[%s0 + $0xc8] sm:$0xf]
  %v81 = vld [vmem:[%s0 + $0xcc] sm:$0xf]
  %v82 = vld [vmem:[%s0 + $0xd0] sm:$0xf]
  %v83 = vld [vmem:[%s0 + $0xd4] sm:$0xf]
  %v84 = vld [vmem:[%s0 + $0xd8] sm:$0xf]
  %v85 = vld [vmem:[%s0 + $0xdc] sm:$0xf]
  %v86 = vld [vmem:[%s0 + $0xe0] sm:$0xf]
  %v87 = vld [vmem:[%s0 + $0xe4] sm:$0xf]
  %v88 = vld [vmem:[%s0 + $0xe8] sm:$0xf]
  %v89 = vld [vmem:[%s0 + $0xec] sm:$0xf]
  %v90 = vld [vmem:[%s0 + $0xf0] sm:$0xf]
  %v91 = vld [vmem:[%s0 + $0xf4] sm:$0xf]
  %v92 = vld [vmem:[%s0 + $0xf8] sm:$0xf]
  %v93 = vld [vmem:[%s0 + $0xfc] sm:$0xf]
  %v94 = vld [vmem:[%s1] sm:$0xff]
  %v95 = vld [vmem:[%s1 + $0x8] sm:$0xff]
  %v96 = vld [vmem:[%s1 + $0x10] sm:$0xff]
  %v97 = vld [vmem:[%s1 + $0x18] sm:$0xff]
  %v98 = vld [vmem:[%s1 + $0x20] sm:$0xff]
  %v99 = vld [vmem:[%s1 + $0x28] sm:$0xff]
  %v100 = vld [vmem:[%s1 + $0x30] sm:$0xff]
  %v101 = vld [vmem:[%s1 + $0x38] sm:$0xff]
  %v102 = vld [vmem:[%s1 + $0x40] sm:$0xff]
  %v103 = vld [vmem:[%s1 + $0x48] sm:$0xff]
  %v104 = vld [vmem:[%s1 + $0x50] sm:$0xff]
  %v105 = vld [vmem:[%s1 + $0x58] sm:$0xff]
  %v106 = vld [vmem:[%s1 + $0x60] sm:$0xff]
  %v107 = vld [vmem:[%s1 + $0x68] sm:$0xff]
  %v108 = vld [vmem:[%s1 + $0x70] sm:$0xff]
  %v109 = vld [vmem:[%s1 + $0x78] sm:$0xff]
  %v110 = vld [vmem:[%s2] sm:$0x3]
  %v112 = vlaneseq
  %v113 = vshrl.u32 %v112, 7
  %v114 = vsub.s32 0, %v113
  %v115 = vrot.slane %v110, %v114
  %v116 = vlaneseq
  %v117 = vshrl.u32 %v116, 7
  %v118 = vsub.s32 1, %v117
  %v119 = vrot.slane %v110, %v118
  %v186 = vunpack.c.l.b16 %v30
  %v187 = vunpack.c.l.b16 %v31
  %v188 = vunpack.c.l.b16 %v32
  %v189 = vunpack.c.l.b16 %v33
  %v190 = vunpack.c.l.b16 %v34
  %v191 = vunpack.c.l.b16 %v35
  %v192 = vunpack.c.l.b16 %v36
  %v193 = vunpack.c.l.b16 %v37
  %v194 = vunpack.c.l.b16 %v38
  %v195 = vunpack.c.l.b16 %v39
  %v196 = vunpack.c.l.b16 %v40
  %v197 = vunpack.c.l.b16 %v41
  %v198 = vunpack.c.l.b16 %v42
  %v199 = vunpack.c.l.b16 %v43
  %v200 = vunpack.c.l.b16 %v44
  %v201 = vunpack.c.l.b16 %v45
  %v202 = vunpack.c.l.b16 %v46
  %v203 = vunpack.c.l.b16 %v47
  %v204 = vunpack.c.l.b16 %v48
  %v205 = vunpack.c.l.b16 %v49
  %v206 = vunpack.c.l.b16 %v50
  %v207 = vunpack.c.l.b16 %v51
  %v208 = vunpack.c.l.b16 %v52
  %v209 = vunpack.c.l.b16 %v53
  %v210 = vunpack.c.l.b16 %v54
  %v211 = vunpack.c.l.b16 %v55
  %v212 = vunpack.c.l.b16 %v56
  %v213 = vunpack.c.l.b16 %v57
  %v214 = vunpack.c.l.b16 %v58
  %v215 = vunpack.c.l.b16 %v59
  %v216 = vunpack.c.l.b16 %v60
  %v217 = vunpack.c.l.b16 %v61
  %v218 = vunpack.c.l.b16 %v62
  %v219 = vunpack.c.l.b16 %v63
  %v220 = vunpack.c.l.b16 %v64
  %v221 = vunpack.c.l.b16 %v65
  %v222 = vunpack.c.l.b16 %v66
  %v223 = vunpack.c.l.b16 %v67
  %v224 = vunpack.c.l.b16 %v68
  %v225 = vunpack.c.l.b16 %v69
  %v226 = vunpack.c.l.b16 %v70
  %v227 = vunpack.c.l.b16 %v71
  %v228 = vunpack.c.l.b16 %v72
  %v229 = vunpack.c.l.b16 %v73
  %v230 = vunpack.c.l.b16 %v74
  %v231 = vunpack.c.l.b16 %v75
  %v232 = vunpack.c.l.b16 %v76
  %v233 = vunpack.c.l.b16 %v77
  %v234 = vunpack.c.l.b16 %v78
  %v235 = vunpack.c.l.b16 %v79
  %v236 = vunpack.c.l.b16 %v80
  %v237 = vunpack.c.l.b16 %v81
  %v238 = vunpack.c.l.b16 %v82
  %v239 = vunpack.c.l.b16 %v83
  %v240 = vunpack.c.l.b16 %v84
  %v241 = vunpack.c.l.b16 %v85
  %v242 = vunpack.c.l.b16 %v86
  %v243 = vunpack.c.l.b16 %v87
  %v244 = vunpack.c.l.b16 %v88
  %v245 = vunpack.c.l.b16 %v89
  %v246 = vunpack.c.l.b16 %v90
  %v247 = vunpack.c.l.b16 %v91
  %v248 = vunpack.c.l.b16 %v92
  %v249 = vunpack.c.l.b16 %v93
  %v250 = vpack.c.b16 %v187, %v186
  %v251 = vpack.c.b16 %v189, %v188
  %v252 = vpack.c.b16 %v191, %v190
  %v253 = vpack.c.b16 %v193, %v192
  %v254 = vpack.c.b16 %v195, %v194
  %v255 = vpack.c.b16 %v197, %v196
  %v256 = vpack.c.b16 %v199, %v198
  %v257 = vpack.c.b16 %v201, %v200
  %v258 = vpack.c.b16 %v203, %v202
  %v259 = vpack.c.b16 %v205, %v204
  %v260 = vpack.c.b16 %v207, %v206
  %v261 = vpack.c.b16 %v209, %v208
  %v262 = vpack.c.b16 %v211, %v210
  %v263 = vpack.c.b16 %v213, %v212
  %v264 = vpack.c.b16 %v215, %v214
  %v265 = vpack.c.b16 %v217, %v216
  %v266 = vpack.c.b16 %v219, %v218
  %v267 = vpack.c.b16 %v221, %v220
  %v268 = vpack.c.b16 %v223, %v222
  %v269 = vpack.c.b16 %v225, %v224
  %v270 = vpack.c.b16 %v227, %v226
  %v271 = vpack.c.b16 %v229, %v228
  %v272 = vpack.c.b16 %v231, %v230
  %v273 = vpack.c.b16 %v233, %v232
  %v274 = vpack.c.b16 %v235, %v234
  %v275 = vpack.c.b16 %v237, %v236
  %v276 = vpack.c.b16 %v239, %v238
  %v277 = vpack.c.b16 %v241, %v240
  %v278 = vpack.c.b16 %v243, %v242
  %v279 = vpack.c.b16 %v245, %v244
  %v280 = vpack.c.b16 %v247, %v246
  %v281 = vpack.c.b16 %v249, %v248
  %v330 = vunpack.c.l.b16 %v94
  %v331 = vunpack.c.h.b16 %v94
  %v332 = vunpack.c.l.b16 %v95
  %v333 = vunpack.c.h.b16 %v95
  %v334 = vunpack.c.l.b16 %v96
  %v335 = vunpack.c.h.b16 %v96
  %v336 = vunpack.c.l.b16 %v97
  %v337 = vunpack.c.h.b16 %v97
  %v338 = vunpack.c.l.b16 %v98
  %v339 = vunpack.c.h.b16 %v98
  %v340 = vunpack.c.l.b16 %v99
  %v341 = vunpack.c.h.b16 %v99
  %v342 = vunpack.c.l.b16 %v100
  %v343 = vunpack.c.h.b16 %v100
  %v344 = vunpack.c.l.b16 %v101
  %v345 = vunpack.c.h.b16 %v101
  %v346 = vunpack.c.l.b16 %v102
  %v347 = vunpack.c.h.b16 %v102
  %v348 = vunpack.c.l.b16 %v103
  %v349 = vunpack.c.h.b16 %v103
  %v350 = vunpack.c.l.b16 %v104
  %v351 = vunpack.c.h.b16 %v104
  %v352 = vunpack.c.l.b16 %v105
  %v353 = vunpack.c.h.b16 %v105
  %v354 = vunpack.c.l.b16 %v106
  %v355 = vunpack.c.h.b16 %v106
  %v356 = vunpack.c.l.b16 %v107
  %v357 = vunpack.c.h.b16 %v107
  %v358 = vunpack.c.l.b16 %v108
  %v359 = vunpack.c.h.b16 %v108
  %v360 = vunpack.c.l.b16 %v109
  %v361 = vunpack.c.h.b16 %v109
  %v362 = vpack.c.b16 %v332, %v330
  %v363 = vpack.c.b16 %v333, %v331
  %v364 = vpack.c.b16 %v336, %v334
  %v365 = vpack.c.b16 %v337, %v335
  %v366 = vpack.c.b16 %v340, %v338
  %v367 = vpack.c.b16 %v341, %v339
  %v368 = vpack.c.b16 %v344, %v342
  %v369 = vpack.c.b16 %v345, %v343
  %v370 = vpack.c.b16 %v348, %v346
  %v371 = vpack.c.b16 %v349, %v347
  %v372 = vpack.c.b16 %v352, %v350
  %v373 = vpack.c.b16 %v353, %v351
  %v374 = vpack.c.b16 %v356, %v354
  %v375 = vpack.c.b16 %v357, %v355
  %v376 = vpack.c.b16 %v360, %v358
  %v377 = vpack.c.b16 %v361, %v359
  %394 = vmatprep.subr.bf16.mxu0 %v363
  %395 = vmatpush1.bf16.msra.mxu0 %v362
  %396 = vmatprep.subr.bf16.mxu0 %v365
  %397 = vmatpush1.bf16.msra.mxu0 %v364
  %398 = vmatprep.subr.bf16.mxu0 %v367
  %399 = vmatpush1.bf16.msra.mxu0 %v366
  %400 = vmatprep.subr.bf16.mxu0 %v369
  %401 = vmatpush1.bf16.msra.mxu0 %v368
  %402 = vmatprep.subr.bf16.mxu0 %v371
  %403 = vmatpush1.bf16.msra.mxu0 %v370
  %404 = vmatprep.subr.bf16.mxu0 %v373
  %405 = vmatpush1.bf16.msra.mxu0 %v372
  %406 = vmatprep.subr.bf16.mxu0 %v375
  %407 = vmatpush1.bf16.msra.mxu0 %v374
  %408 = vmatprep.subr.bf16.mxu0 %v377
  %409 = vmatpush1.bf16.msra.mxu0 %v376
  %410 = vmatprep.subr.bf16.mxu0 0
  %411 = vmatpush1.bf16.msra.mxu0 0
  %412 = vmatprep.subr.bf16.mxu0 0
  %413 = vmatpush1.bf16.msra.mxu0 0
  %414 = vmatprep.subr.bf16.mxu0 0
  %415 = vmatpush1.bf16.msra.mxu0 0
  %416 = vmatprep.subr.bf16.mxu0 0
  %417 = vmatpush1.bf16.msra.mxu0 0
  %418 = vmatprep.subr.bf16.mxu0 0
  %419 = vmatpush1.bf16.msra.mxu0 0
  %420 = vmatprep.subr.bf16.mxu0 0
  %421 = vmatpush1.bf16.msra.mxu0 0
  %422 = vmatprep.subr.bf16.mxu0 0
  %423 = vmatpush1.bf16.msra.mxu0 0
  %424 = vmatprep.subr.bf16.mxu0 0
  %425 = vmatpush1.bf16.msra.mxu0 0
  %426 = vmatprep.mubr.bf16.mxu0 0
  %427 = vmatmul.mubr.bf16.gmra.mrb[0].mxu0 %v250
  %v428 = vpop.f32.mrb[0].mxu0
  %v429 = vadd.f32 %v115, %v428
  %v430 = vpop.f32.mrb[0].mxu0
  %v431 = vadd.f32 %v119, %v430
  %v432 = vpop.f32.mrb[0].mxu0
  %v433 = vadd.f32 %v115, %v432
  %v434 = vpop.f32.mrb[0].mxu0
  %v435 = vadd.f32 %v119, %v434
  %436 = vmatprep.mubr.bf16.mxu0 0
  %437 = vmatmul.mubr.bf16.gmra.mrb[0].mxu0 %v251
  %v438 = vpop.f32.mrb[0].mxu0
  %v439 = vadd.f32 %v115, %v438
  %v440 = vpop.f32.mrb[0].mxu0
  %v441 = vadd.f32 %v119, %v440
  %v442 = vpop.f32.mrb[0].mxu0
  %v443 = vadd.f32 %v115, %v442
  %v444 = vpop.f32.mrb[0].mxu0
  %v445 = vadd.f32 %v119, %v444
  %446 = vmatprep.mubr.bf16.mxu0 0
  %447 = vmatmul.mubr.bf16.gmra.mrb[0].mxu0 %v252
  %v448 = vpop.f32.mrb[0].mxu0
  %v449 = vadd.f32 %v115, %v448
  %v450 = vpop.f32.mrb[0].mxu0
  %v451 = vadd.f32 %v119, %v450
  %v452 = vpop.f32.mrb[0].mxu0
  %v453 = vadd.f32 %v115, %v452
  %v454 = vpop.f32.mrb[0].mxu0
  %v455 = vadd.f32 %v119, %v454
  %456 = vmatprep.mubr.bf16.mxu0 0
  %457 = vmatmul.mubr.bf16.gmra.mrb[0].mxu0 %v253
  %v458 = vpop.f32.mrb[0].mxu0
  %v459 = vadd.f32 %v115, %v458
  %v460 = vpop.f32.mrb[0].mxu0
  %v461 = vadd.f32 %v119, %v460
  %v462 = vpop.f32.mrb[0].mxu0
  %v463 = vadd.f32 %v115, %v462
  %v464 = vpop.f32.mrb[0].mxu0
  %v465 = vadd.f32 %v119, %v464
  %466 = vmatprep.mubr.bf16.mxu0 0
  %467 = vmatmul.mubr.bf16.gmra.mrb[0].mxu0 %v254
  %v468 = vpop.f32.mrb[0].mxu0
  %v469 = vadd.f32 %v115, %v468
  %v470 = vpop.f32.mrb[0].mxu0
  %v471 = vadd.f32 %v119, %v470
  %v472 = vpop.f32.mrb[0].mxu0
  %v473 = vadd.f32 %v115, %v472
  %v474 = vpop.f32.mrb[0].mxu0
  %v475 = vadd.f32 %v119, %v474
  %476 = vmatprep.mubr.bf16.mxu0 0
  %477 = vmatmul.mubr.bf16.gmra.mrb[0].mxu0 %v255
  %v478 = vpop.f32.mrb[0].mxu0
  %v479 = vadd.f32 %v115, %v478
  %v480 = vpop.f32.mrb[0].mxu0
  %v481 = vadd.f32 %v119, %v480
  %v482 = vpop.f32.mrb[0].mxu0
  %v483 = vadd.f32 %v115, %v482
  %v484 = vpop.f32.mrb[0].mxu0
  %v485 = vadd.f32 %v119, %v484
  %486 = vmatprep.mubr.bf16.mxu0 0
  %487 = vmatmul.mubr.bf16.gmra.mrb[0].mxu0 %v256
  %v488 = vpop.f32.mrb[0].mxu0
  %v489 = vadd.f32 %v115, %v488
  %v490 = vpop.f32.mrb[0].mxu0
  %v491 = vadd.f32 %v119, %v490
  %v492 = vpop.f32.mrb[0].mxu0
  %v493 = vadd.f32 %v115, %v492
  %v494 = vpop.f32.mrb[0].mxu0
  %v495 = vadd.f32 %v119, %v494
  %496 = vmatprep.mubr.bf16.mxu0 0
  %497 = vmatmul.mubr.bf16.gmra.mrb[0].mxu0 %v257
  %v498 = vpop.f32.mrb[0].mxu0
  %v499 = vadd.f32 %v115, %v498
  %v500 = vpop.f32.mrb[0].mxu0
  %v501 = vadd.f32 %v119, %v500
  %v502 = vpop.f32.mrb[0].mxu0
  %v503 = vadd.f32 %v115, %v502
  %v504 = vpop.f32.mrb[0].mxu0
  %v505 = vadd.f32 %v119, %v504
  %506 = vmatprep.mubr.bf16.mxu0 0
  %507 = vmatmul.mubr.bf16.gmra.mrb[0].mxu0 %v258
  %v508 = vpop.f32.mrb[0].mxu0
  %v509 = vadd.f32 %v115, %v508
  %v510 = vpop.f32.mrb[0].mxu0
  %v511 = vadd.f32 %v119, %v510
  %v512 = vpop.f32.mrb[0].mxu0
  %v513 = vadd.f32 %v115, %v512
  %v514 = vpop.f32.mrb[0].mxu0
  %v515 = vadd.f32 %v119, %v514
  %516 = vmatprep.mubr.bf16.mxu0 0
  %517 = vmatmul.mubr.bf16.gmra.mrb[0].mxu0 %v259
  %v518 = vpop.f32.mrb[0].mxu0
  %v519 = vadd.f32 %v115, %v518
  %v520 = vpop.f32.mrb[0].mxu0
  %v521 = vadd.f32 %v119, %v520
  %v522 = vpop.f32.mrb[0].mxu0
  %v523 = vadd.f32 %v115, %v522
  %v524 = vpop.f32.mrb[0].mxu0
  %v525 = vadd.f32 %v119, %v524
  %526 = vmatprep.mubr.bf16.mxu0 0
  %527 = vmatmul.mubr.bf16.gmra.mrb[0].mxu0 %v260
  %v528 = vpop.f32.mrb[0].mxu0
  %v529 = vadd.f32 %v115, %v528
  %v530 = vpop.f32.mrb[0].mxu0
  %v531 = vadd.f32 %v119, %v530
  %v532 = vpop.f32.mrb[0].mxu0
  %v533 = vadd.f32 %v115, %v532
  %v534 = vpop.f32.mrb[0].mxu0
  %v535 = vadd.f32 %v119, %v534
  %536 = vmatprep.mubr.bf16.mxu0 0
  %537 = vmatmul.mubr.bf16.gmra.mrb[0].mxu0 %v261
  %v538 = vpop.f32.mrb[0].mxu0
  %v539 = vadd.f32 %v115, %v538
  %v540 = vpop.f32.mrb[0].mxu0
  %v541 = vadd.f32 %v119, %v540
  %v542 = vpop.f32.mrb[0].mxu0
  %v543 = vadd.f32 %v115, %v542
  %v544 = vpop.f32.mrb[0].mxu0
  %v545 = vadd.f32 %v119, %v544
  %546 = vmatprep.mubr.bf16.mxu0 0
  %547 = vmatmul.mubr.bf16.gmra.mrb[0].mxu0 %v262
  %v548 = vpop.f32.mrb[0].mxu0
  %v549 = vadd.f32 %v115, %v548
  %v550 = vpop.f32.mrb[0].mxu0
  %v551 = vadd.f32 %v119, %v550
  %v552 = vpop.f32.mrb[0].mxu0
  %v553 = vadd.f32 %v115, %v552
  %v554 = vpop.f32.mrb[0].mxu0
  %v555 = vadd.f32 %v119, %v554
  %556 = vmatprep.mubr.bf16.mxu0 0
  %557 = vmatmul.mubr.bf16.gmra.mrb[0].mxu0 %v263
  %v558 = vpop.f32.mrb[0].mxu0
  %v559 = vadd.f32 %v115, %v558
  %v560 = vpop.f32.mrb[0].mxu0
  %v561 = vadd.f32 %v119, %v560
  %v562 = vpop.f32.mrb[0].mxu0
  %v563 = vadd.f32 %v115, %v562
  %v564 = vpop.f32.mrb[0].mxu0
  %v565 = vadd.f32 %v119, %v564
  %566 = vmatprep.mubr.bf16.mxu0 0
  %567 = vmatmul.mubr.bf16.gmra.mrb[0].mxu0 %v264
  %v568 = vpop.f32.mrb[0].mxu0
  %v569 = vadd.f32 %v115, %v568
  %v570 = vpop.f32.mrb[0].mxu0
  %v571 = vadd.f32 %v119, %v570
  %v572 = vpop.f32.mrb[0].mxu0
  %v573 = vadd.f32 %v115, %v572
  %v574 = vpop.f32.mrb[0].mxu0
  %v575 = vadd.f32 %v119, %v574
  %576 = vmatprep.mubr.bf16.mxu0 0
  %577 = vmatmul.mubr.bf16.gmra.mrb[0].mxu0 %v265
  %v578 = vpop.f32.mrb[0].mxu0
  %v579 = vadd.f32 %v115, %v578
  %v580 = vpop.f32.mrb[0].mxu0
  %v581 = vadd.f32 %v119, %v580
  %v582 = vpop.f32.mrb[0].mxu0
  %v583 = vadd.f32 %v115, %v582
  %v584 = vpop.f32.mrb[0].mxu0
  %v585 = vadd.f32 %v119, %v584
  %586 = vmatprep.mubr.bf16.mxu0 0
  %587 = vmatmul.mubr.bf16.gmra.mrb[0].mxu0 %v266
  %v588 = vpop.f32.mrb[0].mxu0
  %v589 = vadd.f32 %v115, %v588
  %v590 = vpop.f32.mrb[0].mxu0
  %v591 = vadd.f32 %v119, %v590
  %v592 = vpop.f32.mrb[0].mxu0
  %v593 = vadd.f32 %v115, %v592
  %v594 = vpop.f32.mrb[0].mxu0
  %v595 = vadd.f32 %v119, %v594
  %596 = vmatprep.mubr.bf16.mxu0 0
  %597 = vmatmul.mubr.bf16.gmra.mrb[0].mxu0 %v267
  %v598 = vpop.f32.mrb[0].mxu0
  %v599 = vadd.f32 %v115, %v598
  %v600 = vpop.f32.mrb[0].mxu0
  %v601 = vadd.f32 %v119, %v600
  %v602 = vpop.f32.mrb[0].mxu0
  %v603 = vadd.f32 %v115, %v602
  %v604 = vpop.f32.mrb[0].mxu0
  %v605 = vadd.f32 %v119, %v604
  %606 = vmatprep.mubr.bf16.mxu0 0
  %607 = vmatmul.mubr.bf16.gmra.mrb[0].mxu0 %v268
  %v608 = vpop.f32.mrb[0].mxu0
  %v609 = vadd.f32 %v115, %v608
  %v610 = vpop.f32.mrb[0].mxu0
  %v611 = vadd.f32 %v119, %v610
  %v612 = vpop.f32.mrb[0].mxu0
  %v613 = vadd.f32 %v115, %v612
  %v614 = vpop.f32.mrb[0].mxu0
  %v615 = vadd.f32 %v119, %v614
  %616 = vmatprep.mubr.bf16.mxu0 0
  %617 = vmatmul.mubr.bf16.gmra.mrb[0].mxu0 %v269
  %v618 = vpop.f32.mrb[0].mxu0
  %v619 = vadd.f32 %v115, %v618
  %v620 = vpop.f32.mrb[0].mxu0
  %v621 = vadd.f32 %v119, %v620
  %v622 = vpop.f32.mrb[0].mxu0
  %v623 = vadd.f32 %v115, %v622
  %v624 = vpop.f32.mrb[0].mxu0
  %v625 = vadd.f32 %v119, %v624
  %626 = vmatprep.mubr.bf16.mxu0 0
  %627 = vmatmul.mubr.bf16.gmra.mrb[0].mxu0 %v270
  %v628 = vpop.f32.mrb[0].mxu0
  %v629 = vadd.f32 %v115, %v628
  %v630 = vpop.f32.mrb[0].mxu0
  %v631 = vadd.f32 %v119, %v630
  %v632 = vpop.f32.mrb[0].mxu0
  %v633 = vadd.f32 %v115, %v632
  %v634 = vpop.f32.mrb[0].mxu0
  %v635 = vadd.f32 %v119, %v634
  %636 = vmatprep.mubr.bf16.mxu0 0
  %637 = vmatmul.mubr.bf16.gmra.mrb[0].mxu0 %v271
  %v638 = vpop.f32.mrb[0].mxu0
  %v639 = vadd.f32 %v115, %v638
  %v640 = vpop.f32.mrb[0].mxu0
  %v641 = vadd.f32 %v119, %v640
  %v642 = vpop.f32.mrb[0].mxu0
  %v643 = vadd.f32 %v115, %v642
  %v644 = vpop.f32.mrb[0].mxu0
  %v645 = vadd.f32 %v119, %v644
  %646 = vmatprep.mubr.bf16.mxu0 0
  %647 = vmatmul.mubr.bf16.gmra.mrb[0].mxu0 %v272
  %v648 = vpop.f32.mrb[0].mxu0
  %v649 = vadd.f32 %v115, %v648
  %v650 = vpop.f32.mrb[0].mxu0
  %v651 = vadd.f32 %v119, %v650
  %v652 = vpop.f32.mrb[0].mxu0
  %v653 = vadd.f32 %v115, %v652
  %v654 = vpop.f32.mrb[0].mxu0
  %v655 = vadd.f32 %v119, %v654
  %656 = vmatprep.mubr.bf16.mxu0 0
  %657 = vmatmul.mubr.bf16.gmra.mrb[0].mxu0 %v273
  %v658 = vpop.f32.mrb[0].mxu0
  %v659 = vadd.f32 %v115, %v658
  %v660 = vpop.f32.mrb[0].mxu0
  %v661 = vadd.f32 %v119, %v660
  %v662 = vpop.f32.mrb[0].mxu0
  %v663 = vadd.f32 %v115, %v662
  %v664 = vpop.f32.mrb[0].mxu0
  %v665 = vadd.f32 %v119, %v664
  %666 = vmatprep.mubr.bf16.mxu0 0
  %667 = vmatmul.mubr.bf16.gmra.mrb[0].mxu0 %v274
  %v668 = vpop.f32.mrb[0].mxu0
  %v669 = vadd.f32 %v115, %v668
  %v670 = vpop.f32.mrb[0].mxu0
  %v671 = vadd.f32 %v119, %v670
  %v672 = vpop.f32.mrb[0].mxu0
  %v673 = vadd.f32 %v115, %v672
  %v674 = vpop.f32.mrb[0].mxu0
  %v675 = vadd.f32 %v119, %v674
  %676 = vmatprep.mubr.bf16.mxu0 0
  %677 = vmatmul.mubr.bf16.gmra.mrb[0].mxu0 %v275
  %v678 = vpop.f32.mrb[0].mxu0
  %v679 = vadd.f32 %v115, %v678
  %v680 = vpop.f32.mrb[0].mxu0
  %v681 = vadd.f32 %v119, %v680
  %v682 = vpop.f32.mrb[0].mxu0
  %v683 = vadd.f32 %v115, %v682
  %v684 = vpop.f32.mrb[0].mxu0
  %v685 = vadd.f32 %v119, %v684
  %686 = vmatprep.mubr.bf16.mxu0 0
  %687 = vmatmul.mubr.bf16.gmra.mrb[0].mxu0 %v276
  %v688 = vpop.f32.mrb[0].mxu0
  %v689 = vadd.f32 %v115, %v688
  %v690 = vpop.f32.mrb[0].mxu0
  %v691 = vadd.f32 %v119, %v690
  %v692 = vpop.f32.mrb[0].mxu0
  %v693 = vadd.f32 %v115, %v692
  %v694 = vpop.f32.mrb[0].mxu0
  %v695 = vadd.f32 %v119, %v694
  %696 = vmatprep.mubr.bf16.mxu0 0
  %697 = vmatmul.mubr.bf16.gmra.mrb[0].mxu0 %v277
  %v698 = vpop.f32.mrb[0].mxu0
  %v699 = vadd.f32 %v115, %v698
  %v700 = vpop.f32.mrb[0].mxu0
  %v701 = vadd.f32 %v119, %v700
  %v702 = vpop.f32.mrb[0].mxu0
  %v703 = vadd.f32 %v115, %v702
  %v704 = vpop.f32.mrb[0].mxu0
  %v705 = vadd.f32 %v119, %v704
  %706 = vmatprep.mubr.bf16.mxu0 0
  %707 = vmatmul.mubr.bf16.gmra.mrb[0].mxu0 %v278
  %v708 = vpop.f32.mrb[0].mxu0
  %v709 = vadd.f32 %v115, %v708
  %v710 = vpop.f32.mrb[0].mxu0
  %v711 = vadd.f32 %v119, %v710
  %v712 = vpop.f32.mrb[0].mxu0
  %v713 = vadd.f32 %v115, %v712
  %v714 = vpop.f32.mrb[0].mxu0
  %v715 = vadd.f32 %v119, %v714
  %716 = vmatprep.mubr.bf16.mxu0 0
  %717 = vmatmul.mubr.bf16.gmra.mrb[0].mxu0 %v279
  %v718 = vpop.f32.mrb[0].mxu0
  %v719 = vadd.f32 %v115, %v718
  %v720 = vpop.f32.mrb[0].mxu0
  %v721 = vadd.f32 %v119, %v720
  %v722 = vpop.f32.mrb[0].mxu0
  %v723 = vadd.f32 %v115, %v722
  %v724 = vpop.f32.mrb[0].mxu0
  %v725 = vadd.f32 %v119, %v724
  %726 = vmatprep.mubr.bf16.mxu0 0
  %727 = vmatmul.mubr.bf16.gmra.mrb[0].mxu0 %v280
  %v728 = vpop.f32.mrb[0].mxu0
  %v729 = vadd.f32 %v115, %v728
  %v730 = vpop.f32.mrb[0].mxu0
  %v731 = vadd.f32 %v119, %v730
  %v732 = vpop.f32.mrb[0].mxu0
  %v733 = vadd.f32 %v115, %v732
  %v734 = vpop.f32.mrb[0].mxu0
  %v735 = vadd.f32 %v119, %v734
  %736 = vmatprep.mubr.bf16.mxu0 0
  %737 = vmatmul.mubr.bf16.gmra.mrb[0].mxu0 %v281
  %v738 = vpop.f32.mrb[0].mxu0
  %v739 = vadd.f32 %v115, %v738
  %v740 = vpop.f32.mrb[0].mxu0
  %v741 = vadd.f32 %v119, %v740
  %v742 = vpop.f32.mrb[0].mxu0
  %v743 = vadd.f32 %v115, %v742
  %v744 = vpop.f32.mrb[0].mxu0
  %v745 = vadd.f32 %v119, %v744
  %746 = vdwg.mxu0
  %v747 = vmax.f32 %v429, 0.0
  %v748 = vmax.f32 %v431, 0.0
  %v749 = vmax.f32 %v433, 0.0
  %v750 = vmax.f32 %v435, 0.0
  %v751 = vmax.f32 %v439, 0.0
  %v752 = vmax.f32 %v441, 0.0
  %v753 = vmax.f32 %v443, 0.0
  %v754 = vmax.f32 %v445, 0.0
  %v755 = vmax.f32 %v449, 0.0
  %v756 = vmax.f32 %v451, 0.0
  %v757 = vmax.f32 %v453, 0.0
  %v758 = vmax.f32 %v455, 0.0
  %v759 = vmax.f32 %v459, 0.0
  %v760 = vmax.f32 %v461, 0.0
  %v761 = vmax.f32 %v463, 0.0
  %v762 = vmax.f32 %v465, 0.0
  %v763 = vmax.f32 %v469, 0.0
  %v764 = vmax.f32 %v471, 0.0
  %v765 = vmax.f32 %v473, 0.0
  %v766 = vmax.f32 %v475, 0.0
  %v767 = vmax.f32 %v479, 0.0
  %v768 = vmax.f32 %v481, 0.0
  %v769 = vmax.f32 %v483, 0.0
  %v770 = vmax.f32 %v485, 0.0
  %v771 = vmax.f32 %v489, 0.0
  %v772 = vmax.f32 %v491, 0.0
  %v773 = vmax.f32 %v493, 0.0
  %v774 = vmax.f32 %v495, 0.0
  %v775 = vmax.f32 %v499, 0.0
  %v776 = vmax.f32 %v501, 0.0
  %v777 = vmax.f32 %v503, 0.0
  %v778 = vmax.f32 %v505, 0.0
  %v779 = vmax.f32 %v509, 0.0
  %v780 = vmax.f32 %v511, 0.0
  %v781 = vmax.f32 %v513, 0.0
  %v782 = vmax.f32 %v515, 0.0
  %v783 = vmax.f32 %v519, 0.0
  %v784 = vmax.f32 %v521, 0.0
  %v785 = vmax.f32 %v523, 0.0
  %v786 = vmax.f32 %v525, 0.0
  %v787 = vmax.f32 %v529, 0.0
  %v788 = vmax.f32 %v531, 0.0
  %v789 = vmax.f32 %v533, 0.0
  %v790 = vmax.f32 %v535, 0.0
  %v791 = vmax.f32 %v539, 0.0
  %v792 = vmax.f32 %v541, 0.0
  %v793 = vmax.f32 %v543, 0.0
  %v794 = vmax.f32 %v545, 0.0
  %v795 = vmax.f32 %v549, 0.0
  %v796 = vmax.f32 %v551, 0.0
  %v797 = vmax.f32 %v553, 0.0
  %v798 = vmax.f32 %v555, 0.0
  %v799 = vmax.f32 %v559, 0.0
  %v800 = vmax.f32 %v561, 0.0
  %v801 = vmax.f32 %v563, 0.0
  %v802 = vmax.f32 %v565, 0.0
  %v803 = vmax.f32 %v569, 0.0
  %v804 = vmax.f32 %v571, 0.0
  %v805 = vmax.f32 %v573, 0.0
  %v806 = vmax.f32 %v575, 0.0
  %v807 = vmax.f32 %v579, 0.0
  %v808 = vmax.f32 %v581, 0.0
  %v809 = vmax.f32 %v583, 0.0
  %v810 = vmax.f32 %v585, 0.0
  %v811 = vmax.f32 %v589, 0.0
  %v812 = vmax.f32 %v591, 0.0
  %v813 = vmax.f32 %v593, 0.0
  %v814 = vmax.f32 %v595, 0.0
  %v815 = vmax.f32 %v599, 0.0
  %v816 = vmax.f32 %v601, 0.0
  %v817 = vmax.f32 %v603, 0.0
  %v818 = vmax.f32 %v605, 0.0
  %v819 = vmax.f32 %v609, 0.0
  %v820 = vmax.f32 %v611, 0.0
  %v821 = vmax.f32 %v613, 0.0
  %v822 = vmax.f32 %v615, 0.0
  %v823 = vmax.f32 %v619, 0.0
  %v824 = vmax.f32 %v621, 0.0
  %v825 = vmax.f32 %v623, 0.0
  %v826 = vmax.f32 %v625, 0.0
  %v827 = vmax.f32 %v629, 0.0
  %v828 = vmax.f32 %v631, 0.0
  %v829 = vmax.f32 %v633, 0.0
  %v830 = vmax.f32 %v635, 0.0
  %v831 = vmax.f32 %v639, 0.0
  %v832 = vmax.f32 %v641, 0.0
  %v833 = vmax.f32 %v643, 0.0
  %v834 = vmax.f32 %v645, 0.0
  %v835 = vmax.f32 %v649, 0.0
  %v836 = vmax.f32 %v651, 0.0
  %v837 = vmax.f32 %v653, 0.0
  %v838 = vmax.f32 %v655, 0.0
  %v839 = vmax.f32 %v659, 0.0
  %v840 = vmax.f32 %v661, 0.0
  %v841 = vmax.f32 %v663, 0.0
  %v842 = vmax.f32 %v665, 0.0
  %v843 = vmax.f32 %v669, 0.0
  %v844 = vmax.f32 %v671, 0.0
  %v845 = vmax.f32 %v673, 0.0
  %v846 = vmax.f32 %v675, 0.0
  %v847 = vmax.f32 %v679, 0.0
  %v848 = vmax.f32 %v681, 0.0
  %v849 = vmax.f32 %v683, 0.0
  %v850 = vmax.f32 %v685, 0.0
  %v851 = vmax.f32 %v689, 0.0
  %v852 = vmax.f32 %v691, 0.0
  %v853 = vmax.f32 %v693, 0.0
  %v854 = vmax.f32 %v695, 0.0
  %v855 = vmax.f32 %v699, 0.0
  %v856 = vmax.f32 %v701, 0.0
  %v857 = vmax.f32 %v703, 0.0
  %v858 = vmax.f32 %v705, 0.0
  %v859 = vmax.f32 %v709, 0.0
  %v860 = vmax.f32 %v711, 0.0
  %v861 = vmax.f32 %v713, 0.0
  %v862 = vmax.f32 %v715, 0.0
  %v863 = vmax.f32 %v719, 0.0
  %v864 = vmax.f32 %v721, 0.0
  %v865 = vmax.f32 %v723, 0.0
  %v866 = vmax.f32 %v725, 0.0
  %v867 = vmax.f32 %v729, 0.0
  %v868 = vmax.f32 %v731, 0.0
  %v869 = vmax.f32 %v733, 0.0
  %v870 = vmax.f32 %v735, 0.0
  %v871 = vmax.f32 %v739, 0.0
  %v872 = vmax.f32 %v741, 0.0
  %v873 = vmax.f32 %v743, 0.0
  %v874 = vmax.f32 %v745, 0.0
  %v875 = vld [vmem:[%s3] sm:$0xff]
  %v876 = vld [vmem:[%s3 + $0x8] sm:$0xff]
  %v877 = vpack.c.bf16 %v749, %v747
  %v878 = vpack.c.bf16 %v750, %v748
  %v879 = vpack.c.bf16 %v753, %v751
  %v880 = vpack.c.bf16 %v754, %v752
  %v881 = vpack.c.bf16 %v757, %v755
  %v882 = vpack.c.bf16 %v758, %v756
  %v883 = vpack.c.bf16 %v761, %v759
  %v884 = vpack.c.bf16 %v762, %v760
  %v885 = vpack.c.bf16 %v765, %v763
  %v886 = vpack.c.bf16 %v766, %v764
  %v887 = vpack.c.bf16 %v769, %v767
  %v888 = vpack.c.bf16 %v770, %v768
  %v889 = vpack.c.bf16 %v773, %v771
  %v890 = vpack.c.bf16 %v774, %v772
  %v891 = vpack.c.bf16 %v777, %v775
  %v892 = vpack.c.bf16 %v778, %v776
  %v893 = vpack.c.bf16 %v781, %v779
  %v894 = vpack.c.bf16 %v782, %v780
  %v895 = vpack.c.bf16 %v785, %v783
  %v896 = vpack.c.bf16 %v786, %v784
  %v897 = vpack.c.bf16 %v789, %v787
  %v898 = vpack.c.bf16 %v790, %v788
  %v899 = vpack.c.bf16 %v793, %v791
  %v900 = vpack.c.bf16 %v794, %v792
  %v901 = vpack.c.bf16 %v797, %v795
  %v902 = vpack.c.bf16 %v798, %v796
  %v903 = vpack.c.bf16 %v801, %v799
  %v904 = vpack.c.bf16 %v802, %v800
  %v905 = vpack.c.bf16 %v805, %v803
  %v906 = vpack.c.bf16 %v806, %v804
  %v907 = vpack.c.bf16 %v809, %v807
  %v908 = vpack.c.bf16 %v810, %v808
  %v909 = vpack.c.bf16 %v813, %v811
  %v910 = vpack.c.bf16 %v814, %v812
  %v911 = vpack.c.bf16 %v817, %v815
  %v912 = vpack.c.bf16 %v818, %v816
  %v913 = vpack.c.bf16 %v821, %v819
  %v914 = vpack.c.bf16 %v822, %v820
  %v915 = vpack.c.bf16 %v825, %v823
  %v916 = vpack.c.bf16 %v826, %v824
  %v917 = vpack.c.bf16 %v829, %v827
  %v918 = vpack.c.bf16 %v830, %v828
  %v919 = vpack.c.bf16 %v833, %v831
  %v920 = vpack.c.bf16 %v834, %v832
  %v921 = vpack.c.bf16 %v837, %v835
  %v922 = vpack.c.bf16 %v838, %v836
  %v923 = vpack.c.bf16 %v841, %v839
  %v924 = vpack.c.bf16 %v842, %v840
  %v925 = vpack.c.bf16 %v845, %v843
  %v926 = vpack.c.bf16 %v846, %v844
  %v927 = vpack.c.bf16 %v849, %v847
  %v928 = vpack.c.bf16 %v850, %v848
  %v929 = vpack.c.bf16 %v853, %v851
  %v930 = vpack.c.bf16 %v854, %v852
  %v931 = vpack.c.bf16 %v857, %v855
  %v932 = vpack.c.bf16 %v858, %v856
  %v933 = vpack.c.bf16 %v861, %v859
  %v934 = vpack.c.bf16 %v862, %v860
  %v935 = vpack.c.bf16 %v865, %v863
  %v936 = vpack.c.bf16 %v866, %v864
  %v937 = vpack.c.bf16 %v869, %v867
  %v938 = vpack.c.bf16 %v870, %v868
  %v939 = vpack.c.bf16 %v873, %v871
  %v940 = vpack.c.bf16 %v874, %v872
  %v943 = vunpack.c.l.b16 %v875
  %v944 = vunpack.c.h.b16 %v875
  %v945 = vunpack.c.l.b16 %v876
  %v946 = vunpack.c.h.b16 %v876
  %v947 = vpack.c.b16 %v943, %v943
  %v948 = vpack.c.b16 %v944, %v944
  %v949 = vpack.c.b16 %v945, %v945
  %v950 = vpack.c.b16 %v946, %v946
  %955 = vmatprep.subr.bf16.mxu0 %v878
  %956 = vmatpush1.bf16.msra.mxu0 %v877
  %957 = vmatprep.subr.bf16.mxu0 %v880
  %958 = vmatpush1.bf16.msra.mxu0 %v879
  %959 = vmatprep.subr.bf16.mxu0 %v882
  %960 = vmatpush1.bf16.msra.mxu0 %v881
  %961 = vmatprep.subr.bf16.mxu0 %v884
  %962 = vmatpush1.bf16.msra.mxu0 %v883
  %963 = vmatprep.subr.bf16.mxu0 %v886
  %964 = vmatpush1.bf16.msra.mxu0 %v885
  %965 = vmatprep.subr.bf16.mxu0 %v888
  %966 = vmatpush1.bf16.msra.mxu0 %v887
  %967 = vmatprep.subr.bf16.mxu0 %v890
  %968 = vmatpush1.bf16.msra.mxu0 %v889
  %969 = vmatprep.subr.bf16.mxu0 %v892
  %970 = vmatpush1.bf16.msra.mxu0 %v891
  %971 = vmatprep.subr.bf16.mxu0 %v894
  %972 = vmatpush1.bf16.msra.mxu0 %v893
  %973 = vmatprep.subr.bf16.mxu0 %v896
  %974 = vmatpush1.bf16.msra.mxu0 %v895
  %975 = vmatprep.subr.bf16.mxu0 %v898
  %976 = vmatpush1.bf16.msra.mxu0 %v897
  %977 = vmatprep.subr.bf16.mxu0 %v900
  %978 = vmatpush1.bf16.msra.mxu0 %v899
  %979 = vmatprep.subr.bf16.mxu0 %v902
  %980 = vmatpush1.bf16.msra.mxu0 %v901
  %981 = vmatprep.subr.bf16.mxu0 %v904
  %982 = vmatpush1.bf16.msra.mxu0 %v903
  %983 = vmatprep.subr.bf16.mxu0 %v906
  %984 = vmatpush1.bf16.msra.mxu0 %v905
  %985 = vmatprep.subr.bf16.mxu0 %v908
  %986 = vmatpush1.bf16.msra.mxu0 %v907
  %987 = vmatprep.mubr.bf16.mxu0 %v948
  %988 = vmatmul.mubr.bf16.gmra.mrb[0].mxu0 %v947
  %v989 = vpop.f32.mrb[0].mxu0
  %v990 = vadd.f32 0.0, %v989
  %v991 = vpop.f32.mrb[0].mxu0
  %v992 = vadd.f32 0.0, %v991
  %v993 = vpop.f32.mrb[0].mxu0
  %v994 = vpop.f32.mrb[0].mxu0
  %995 = vdwg.mxu0
  %996 = vmatprep.subr.bf16.mxu0 %v910
  %997 = vmatpush1.bf16.msra.mxu0 %v909
  %998 = vmatprep.subr.bf16.mxu0 %v912
  %999 = vmatpush1.bf16.msra.mxu0 %v911
  %1000 = vmatprep.subr.bf16.mxu0 %v914
  %1001 = vmatpush1.bf16.msra.mxu0 %v913
  %1002 = vmatprep.subr.bf16.mxu0 %v916
  %1003 = vmatpush1.bf16.msra.mxu0 %v915
  %1004 = vmatprep.subr.bf16.mxu0 %v918
  %1005 = vmatpush1.bf16.msra.mxu0 %v917
  %1006 = vmatprep.subr.bf16.mxu0 %v920
  %1007 = vmatpush1.bf16.msra.mxu0 %v919
  %1008 = vmatprep.subr.bf16.mxu0 %v922
  %1009 = vmatpush1.bf16.msra.mxu0 %v921
  %1010 = vmatprep.subr.bf16.mxu0 %v924
  %1011 = vmatpush1.bf16.msra.mxu0 %v923
  %1012 = vmatprep.subr.bf16.mxu0 %v926
  %1013 = vmatpush1.bf16.msra.mxu0 %v925
  %1014 = vmatprep.subr.bf16.mxu0 %v928
  %1015 = vmatpush1.bf16.msra.mxu0 %v927
  %1016 = vmatprep.subr.bf16.mxu0 %v930
  %1017 = vmatpush1.bf16.msra.mxu0 %v929
  %1018 = vmatprep.subr.bf16.mxu0 %v932
  %1019 = vmatpush1.bf16.msra.mxu0 %v931
  %1020 = vmatprep.subr.bf16.mxu0 %v934
  %1021 = vmatpush1.bf16.msra.mxu0 %v933
  %1022 = vmatprep.subr.bf16.mxu0 %v936
  %1023 = vmatpush1.bf16.msra.mxu0 %v935
  %1024 = vmatprep.subr.bf16.mxu0 %v938
  %1025 = vmatpush1.bf16.msra.mxu0 %v937
  %1026 = vmatprep.subr.bf16.mxu0 %v940
  %1027 = vmatpush1.bf16.msra.mxu0 %v939
  %1028 = vmatprep.mubr.bf16.mxu0 %v950
  %1029 = vmatmul.mubr.bf16.gmra.mrb[0].mxu0 %v949
  %v1030 = vpop.f32.mrb[0].mxu0
  %v1031 = vadd.f32 %v990, %v1030
  %v1032 = vpop.f32.mrb[0].mxu0
  %v1033 = vadd.f32 %v992, %v1032
  %v1034 = vpop.f32.mrb[0].mxu0
  %v1035 = vpop.f32.mrb[0].mxu0
  %1036 = vdwg.mxu0
  %v1037 = vpack.c.bf16 %v1031, %v1031
  %v1038 = vpack.c.bf16 %v1033, %v1033
  %v1039 = vld [vmem:[%s4] sm:$0xff]
  %v1040 = vld [vmem:[%s4 + $0x8] sm:$0xff]
  %v1041 = vld [vmem:[%s4 + $0x10] sm:$0xff]
  %v1042 = vld [vmem:[%s4 + $0x18] sm:$0xff]
  %v1043 = vld [vmem:[%s4 + $0x20] sm:$0xff]
  %v1044 = vld [vmem:[%s4 + $0x28] sm:$0xff]
  %v1045 = vld [vmem:[%s4 + $0x30] sm:$0xff]
  %v1046 = vld [vmem:[%s4 + $0x38] sm:$0xff]
  %v1047 = vld [vmem:[%s4 + $0x40] sm:$0xff]
  %v1048 = vld [vmem:[%s4 + $0x48] sm:$0xff]
  %v1049 = vld [vmem:[%s4 + $0x50] sm:$0xff]
  %v1050 = vld [vmem:[%s4 + $0x58] sm:$0xff]
  %v1051 = vld [vmem:[%s4 + $0x60] sm:$0xff]
  %v1052 = vld [vmem:[%s4 + $0x68] sm:$0xff]
  %v1053 = vld [vmem:[%s4 + $0x70] sm:$0xff]
  %v1054 = vld [vmem:[%s4 + $0x78] sm:$0xff]
  %v1055 = vld [vmem:[%s4 + $0x80] sm:$0xff]
  %v1056 = vld [vmem:[%s4 + $0x88] sm:$0xff]
  %v1057 = vld [vmem:[%s4 + $0x90] sm:$0xff]
  %v1058 = vld [vmem:[%s4 + $0x98] sm:$0xff]
  %v1059 = vld [vmem:[%s4 + $0xa0] sm:$0xff]
  %v1060 = vld [vmem:[%s4 + $0xa8] sm:$0xff]
  %v1061 = vld [vmem:[%s4 + $0xb0] sm:$0xff]
  %v1062 = vld [vmem:[%s4 + $0xb8] sm:$0xff]
  %v1063 = vld [vmem:[%s4 + $0xc0] sm:$0xff]
  %v1064 = vld [vmem:[%s4 + $0xc8] sm:$0xff]
  %v1065 = vld [vmem:[%s4 + $0xd0] sm:$0xff]
  %v1066 = vld [vmem:[%s4 + $0xd8] sm:$0xff]
  %v1067 = vld [vmem:[%s4 + $0xe0] sm:$0xff]
  %v1068 = vld [vmem:[%s4 + $0xe8] sm:$0xff]
  %v1069 = vld [vmem:[%s4 + $0xf0] sm:$0xff]
  %v1070 = vld [vmem:[%s4 + $0xf8] sm:$0xff]
  %v1071 = vld [vmem:[%s4 + $0x100] sm:$0xff]
  %v1072 = vld [vmem:[%s4 + $0x108] sm:$0xff]
  %v1073 = vld [vmem:[%s4 + $0x110] sm:$0xff]
  %v1074 = vld [vmem:[%s4 + $0x118] sm:$0xff]
  %v1075 = vld [vmem:[%s4 + $0x120] sm:$0xff]
  %v1076 = vld [vmem:[%s4 + $0x128] sm:$0xff]
  %v1077 = vld [vmem:[%s4 + $0x130] sm:$0xff]
  %v1078 = vld [vmem:[%s4 + $0x138] sm:$0xff]
  %v1079 = vld [vmem:[%s4 + $0x140] sm:$0xff]
  %v1080 = vld [vmem:[%s4 + $0x148] sm:$0xff]
  %v1081 = vld [vmem:[%s4 + $0x150] sm:$0xff]
  %v1082 = vld [vmem:[%s4 + $0x158] sm:$0xff]
  %v1083 = vld [vmem:[%s4 + $0x160] sm:$0xff]
  %v1084 = vld [vmem:[%s4 + $0x168] sm:$0xff]
  %v1085 = vld [vmem:[%s4 + $0x170] sm:$0xff]
  %v1086 = vld [vmem:[%s4 + $0x178] sm:$0xff]
  %v1087 = vld [vmem:[%s4 + $0x180] sm:$0xff]
  %v1088 = vld [vmem:[%s4 + $0x188] sm:$0xff]
  %v1089 = vld [vmem:[%s4 + $0x190] sm:$0xff]
  %v1090 = vld [vmem:[%s4 + $0x198] sm:$0xff]
  %v1091 = vld [vmem:[%s4 + $0x1a0] sm:$0xff]
  %v1092 = vld [vmem:[%s4 + $0x1a8] sm:$0xff]
  %v1093 = vld [vmem:[%s4 + $0x1b0] sm:$0xff]
  %v1094 = vld [vmem:[%s4 + $0x1b8] sm:$0xff]
  %v1095 = vld [vmem:[%s4 + $0x1c0] sm:$0xff]
  %v1096 = vld [vmem:[%s4 + $0x1c8] sm:$0xff]
  %v1097 = vld [vmem:[%s4 + $0x1d0] sm:$0xff]
  %v1098 = vld [vmem:[%s4 + $0x1d8] sm:$0xff]
  %v1099 = vld [vmem:[%s4 + $0x1e0] sm:$0xff]
  %v1100 = vld [vmem:[%s4 + $0x1e8] sm:$0xff]
  %v1101 = vld [vmem:[%s4 + $0x1f0] sm:$0xff]
  %v1102 = vld [vmem:[%s4 + $0x1f8] sm:$0xff]
  %v1103 = vld [vmem:[%s5] sm:$0xf]
  %v1105 = vlaneseq
  %v1106 = vshrl.u32 %v1105, 7
  %v1107 = vsub.s32 0, %v1106
  %v1108 = vrot.slane %v1103, %v1107
  %v1109 = vlaneseq
  %v1110 = vshrl.u32 %v1109, 7
  %v1111 = vsub.s32 1, %v1110
  %v1112 = vrot.slane %v1103, %v1111
  %v1113 = vlaneseq
  %v1114 = vshrl.u32 %v1113, 7
  %v1115 = vsub.s32 2, %v1114
  %v1116 = vrot.slane %v1103, %v1115
  %v1117 = vlaneseq
  %v1118 = vshrl.u32 %v1117, 7
  %v1119 = vsub.s32 3, %v1118
  %v1120 = vrot.slane %v1103, %v1119
  %v1189 = vunpack.c.l.b16 %v1039
  %v1190 = vunpack.c.h.b16 %v1039
  %v1191 = vunpack.c.l.b16 %v1040
  %v1192 = vunpack.c.h.b16 %v1040
  %v1193 = vunpack.c.l.b16 %v1041
  %v1194 = vunpack.c.h.b16 %v1041
  %v1195 = vunpack.c.l.b16 %v1042
  %v1196 = vunpack.c.h.b16 %v1042
  %v1197 = vunpack.c.l.b16 %v1043
  %v1198 = vunpack.c.h.b16 %v1043
  %v1199 = vunpack.c.l.b16 %v1044
  %v1200 = vunpack.c.h.b16 %v1044
  %v1201 = vunpack.c.l.b16 %v1045
  %v1202 = vunpack.c.h.b16 %v1045
  %v1203 = vunpack.c.l.b16 %v1046
  %v1204 = vunpack.c.h.b16 %v1046
  %v1205 = vunpack.c.l.b16 %v1047
  %v1206 = vunpack.c.h.b16 %v1047
  %v1207 = vunpack.c.l.b16 %v1048
  %v1208 = vunpack.c.h.b16 %v1048
  %v1209 = vunpack.c.l.b16 %v1049
  %v1210 = vunpack.c.h.b16 %v1049
  %v1211 = vunpack.c.l.b16 %v1050
  %v1212 = vunpack.c.h.b16 %v1050
  %v1213 = vunpack.c.l.b16 %v1051
  %v1214 = vunpack.c.h.b16 %v1051
  %v1215 = vunpack.c.l.b16 %v1052
  %v1216 = vunpack.c.h.b16 %v1052
  %v1217 = vunpack.c.l.b16 %v1053
  %v1218 = vunpack.c.h.b16 %v1053
  %v1219 = vunpack.c.l.b16 %v1054
  %v1220 = vunpack.c.h.b16 %v1054
  %v1221 = vunpack.c.l.b16 %v1055
  %v1222 = vunpack.c.h.b16 %v1055
  %v1223 = vunpack.c.l.b16 %v1056
  %v1224 = vunpack.c.h.b16 %v1056
  %v1225 = vunpack.c.l.b16 %v1057
  %v1226 = vunpack.c.h.b16 %v1057
  %v1227 = vunpack.c.l.b16 %v1058
  %v1228 = vunpack.c.h.b16 %v1058
  %v1229 = vunpack.c.l.b16 %v1059
  %v1230 = vunpack.c.h.b16 %v1059
  %v1231 = vunpack.c.l.b16 %v1060
  %v1232 = vunpack.c.h.b16 %v1060
  %v1233 = vunpack.c.l.b16 %v1061
  %v1234 = vunpack.c.h.b16 %v1061
  %v1235 = vunpack.c.l.b16 %v1062
  %v1236 = vunpack.c.h.b16 %v1062
  %v1237 = vunpack.c.l.b16 %v1063
  %v1238 = vunpack.c.h.b16 %v1063
  %v1239 = vunpack.c.l.b16 %v1064
  %v1240 = vunpack.c.h.b16 %v1064
  %v1241 = vunpack.c.l.b16 %v1065
  %v1242 = vunpack.c.h.b16 %v1065
  %v1243 = vunpack.c.l.b16 %v1066
  %v1244 = vunpack.c.h.b16 %v1066
  %v1245 = vunpack.c.l.b16 %v1067
  %v1246 = vunpack.c.h.b16 %v1067
  %v1247 = vunpack.c.l.b16 %v1068
  %v1248 = vunpack.c.h.b16 %v1068
  %v1249 = vunpack.c.l.b16 %v1069
  %v1250 = vunpack.c.h.b16 %v1069
  %v1251 = vunpack.c.l.b16 %v1070
  %v1252 = vunpack.c.h.b16 %v1070
  %v1253 = vunpack.c.l.b16 %v1071
  %v1254 = vunpack.c.h.b16 %v1071
  %v1255 = vunpack.c.l.b16 %v1072
  %v1256 = vunpack.c.h.b16 %v1072
  %v1257 = vunpack.c.l.b16 %v1073
  %v1258 = vunpack.c.h.b16 %v1073
  %v1259 = vunpack.c.l.b16 %v1074
  %v1260 = vunpack.c.h.b16 %v1074
  %v1261 = vunpack.c.l.b16 %v1075
  %v1262 = vunpack.c.h.b16 %v1075
  %v1263 = vunpack.c.l.b16 %v1076
  %v1264 = vunpack.c.h.b16 %v1076
  %v1265 = vunpack.c.l.b16 %v1077
  %v1266 = vunpack.c.h.b16 %v1077
  %v1267 = vunpack.c.l.b16 %v1078
  %v1268 = vunpack.c.h.b16 %v1078
  %v1269 = vunpack.c.l.b16 %v1079
  %v1270 = vunpack.c.h.b16 %v1079
  %v1271 = vunpack.c.l.b16 %v1080
  %v1272 = vunpack.c.h.b16 %v1080
  %v1273 = vunpack.c.l.b16 %v1081
  %v1274 = vunpack.c.h.b16 %v1081
  %v1275 = vunpack.c.l.b16 %v1082
  %v1276 = vunpack.c.h.b16 %v1082
  %v1277 = vunpack.c.l.b16 %v1083
  %v1278 = vunpack.c.h.b16 %v1083
  %v1279 = vunpack.c.l.b16 %v1084
  %v1280 = vunpack.c.h.b16 %v1084
  %v1281 = vunpack.c.l.b16 %v1085
  %v1282 = vunpack.c.h.b16 %v1085
  %v1283 = vunpack.c.l.b16 %v1086
  %v1284 = vunpack.c.h.b16 %v1086
  %v1285 = vunpack.c.l.b16 %v1087
  %v1286 = vunpack.c.h.b16 %v1087
  %v1287 = vunpack.c.l.b16 %v1088
  %v1288 = vunpack.c.h.b16 %v1088
  %v1289 = vunpack.c.l.b16 %v1089
  %v1290 = vunpack.c.h.b16 %v1089
  %v1291 = vunpack.c.l.b16 %v1090
  %v1292 = vunpack.c.h.b16 %v1090
  %v1293 = vunpack.c.l.b16 %v1091
  %v1294 = vunpack.c.h.b16 %v1091
  %v1295 = vunpack.c.l.b16 %v1092
  %v1296 = vunpack.c.h.b16 %v1092
  %v1297 = vunpack.c.l.b16 %v1093
  %v1298 = vunpack.c.h.b16 %v1093
  %v1299 = vunpack.c.l.b16 %v1094
  %v1300 = vunpack.c.h.b16 %v1094
  %v1301 = vunpack.c.l.b16 %v1095
  %v1302 = vunpack.c.h.b16 %v1095
  %v1303 = vunpack.c.l.b16 %v1096
  %v1304 = vunpack.c.h.b16 %v1096
  %v1305 = vunpack.c.l.b16 %v1097
  %v1306 = vunpack.c.h.b16 %v1097
  %v1307 = vunpack.c.l.b16 %v1098
  %v1308 = vunpack.c.h.b16 %v1098
  %v1309 = vunpack.c.l.b16 %v1099
  %v1310 = vunpack.c.h.b16 %v1099
  %v1311 = vunpack.c.l.b16 %v1100
  %v1312 = vunpack.c.h.b16 %v1100
  %v1313 = vunpack.c.l.b16 %v1101
  %v1314 = vunpack.c.h.b16 %v1101
  %v1315 = vunpack.c.l.b16 %v1102
  %v1316 = vunpack.c.h.b16 %v1102
  %v1317 = vpack.c.b16 %v1193, %v1189
  %v1318 = vpack.c.b16 %v1194, %v1190
  %v1319 = vpack.c.b16 %v1195, %v1191
  %v1320 = vpack.c.b16 %v1196, %v1192
  %v1321 = vpack.c.b16 %v1201, %v1197
  %v1322 = vpack.c.b16 %v1202, %v1198
  %v1323 = vpack.c.b16 %v1203, %v1199
  %v1324 = vpack.c.b16 %v1204, %v1200
  %v1325 = vpack.c.b16 %v1209, %v1205
  %v1326 = vpack.c.b16 %v1210, %v1206
  %v1327 = vpack.c.b16 %v1211, %v1207
  %v1328 = vpack.c.b16 %v1212, %v1208
  %v1329 = vpack.c.b16 %v1217, %v1213
  %v1330 = vpack.c.b16 %v1218, %v1214
  %v1331 = vpack.c.b16 %v1219, %v1215
  %v1332 = vpack.c.b16 %v1220, %v1216
  %v1333 = vpack.c.b16 %v1225, %v1221
  %v1334 = vpack.c.b16 %v1226, %v1222
  %v1335 = vpack.c.b16 %v1227, %v1223
  %v1336 = vpack.c.b16 %v1228, %v1224
  %v1337 = vpack.c.b16 %v1233, %v1229
  %v1338 = vpack.c.b16 %v1234, %v1230
  %v1339 = vpack.c.b16 %v1235, %v1231
  %v1340 = vpack.c.b16 %v1236, %v1232
  %v1341 = vpack.c.b16 %v1241, %v1237
  %v1342 = vpack.c.b16 %v1242, %v1238
  %v1343 = vpack.c.b16 %v1243, %v1239
  %v1344 = vpack.c.b16 %v1244, %v1240
  %v1345 = vpack.c.b16 %v1249, %v1245
  %v1346 = vpack.c.b16 %v1250, %v1246
  %v1347 = vpack.c.b16 %v1251, %v1247
  %v1348 = vpack.c.b16 %v1252, %v1248
  %v1349 = vpack.c.b16 %v1257, %v1253
  %v1350 = vpack.c.b16 %v1258, %v1254
  %v1351 = vpack.c.b16 %v1259, %v1255
  %v1352 = vpack.c.b16 %v1260, %v1256
  %v1353 = vpack.c.b16 %v1265, %v1261
  %v1354 = vpack.c.b16 %v1266, %v1262
  %v1355 = vpack.c.b16 %v1267, %v1263
  %v1356 = vpack.c.b16 %v1268, %v1264
  %v1357 = vpack.c.b16 %v1273, %v1269
  %v1358 = vpack.c.b16 %v1274, %v1270
  %v1359 = vpack.c.b16 %v1275, %v1271
  %v1360 = vpack.c.b16 %v1276, %v1272
  %v1361 = vpack.c.b16 %v1281, %v1277
  %v1362 = vpack.c.b16 %v1282, %v1278
  %v1363 = vpack.c.b16 %v1283, %v1279
  %v1364 = vpack.c.b16 %v1284, %v1280
  %v1365 = vpack.c.b16 %v1289, %v1285
  %v1366 = vpack.c.b16 %v1290, %v1286
  %v1367 = vpack.c.b16 %v1291, %v1287
  %v1368 = vpack.c.b16 %v1292, %v1288
  %v1369 = vpack.c.b16 %v1297, %v1293
  %v1370 = vpack.c.b16 %v1298, %v1294
  %v1371 = vpack.c.b16 %v1299, %v1295
  %v1372 = vpack.c.b16 %v1300, %v1296
  %v1373 = vpack.c.b16 %v1305, %v1301
  %v1374 = vpack.c.b16 %v1306, %v1302
  %v1375 = vpack.c.b16 %v1307, %v1303
  %v1376 = vpack.c.b16 %v1308, %v1304
  %v1377 = vpack.c.b16 %v1313, %v1309
  %v1378 = vpack.c.b16 %v1314, %v1310
  %v1379 = vpack.c.b16 %v1315, %v1311
  %v1380 = vpack.c.b16 %v1316, %v1312
  %1445 = vmatprep.subr.bf16.mxu0 %v1318
  %1446 = vmatpush1.bf16.msra.mxu0 %v1317
  %1447 = vmatprep.subr.bf16.mxu0 %v1322
  %1448 = vmatpush1.bf16.msra.mxu0 %v1321
  %1449 = vmatprep.subr.bf16.mxu0 %v1326
  %1450 = vmatpush1.bf16.msra.mxu0 %v1325
  %1451 = vmatprep.subr.bf16.mxu0 %v1330
  %1452 = vmatpush1.bf16.msra.mxu0 %v1329
  %1453 = vmatprep.subr.bf16.mxu0 %v1334
  %1454 = vmatpush1.bf16.msra.mxu0 %v1333
  %1455 = vmatprep.subr.bf16.mxu0 %v1338
  %1456 = vmatpush1.bf16.msra.mxu0 %v1337
  %1457 = vmatprep.subr.bf16.mxu0 %v1342
  %1458 = vmatpush1.bf16.msra.mxu0 %v1341
  %1459 = vmatprep.subr.bf16.mxu0 %v1346
  %1460 = vmatpush1.bf16.msra.mxu0 %v1345
  %1461 = vmatprep.subr.bf16.mxu0 %v1350
  %1462 = vmatpush1.bf16.msra.mxu0 %v1349
  %1463 = vmatprep.subr.bf16.mxu0 %v1354
  %1464 = vmatpush1.bf16.msra.mxu0 %v1353
  %1465 = vmatprep.subr.bf16.mxu0 %v1358
  %1466 = vmatpush1.bf16.msra.mxu0 %v1357
  %1467 = vmatprep.subr.bf16.mxu0 %v1362
  %1468 = vmatpush1.bf16.msra.mxu0 %v1361
  %1469 = vmatprep.subr.bf16.mxu0 %v1366
  %1470 = vmatpush1.bf16.msra.mxu0 %v1365
  %1471 = vmatprep.subr.bf16.mxu0 %v1370
  %1472 = vmatpush1.bf16.msra.mxu0 %v1369
  %1473 = vmatprep.subr.bf16.mxu0 %v1374
  %1474 = vmatpush1.bf16.msra.mxu0 %v1373
  %1475 = vmatprep.subr.bf16.mxu0 %v1378
  %1476 = vmatpush1.bf16.msra.mxu0 %v1377
  %1477 = vmatprep.mubr.bf16.mxu0 %v1038
  %1478 = vmatmul.mubr.bf16.gmra.mrb[0].mxu0 %v1037
  %v1479 = vpop.f32.mrb[0].mxu0
  %v1480 = vadd.f32 %v1108, %v1479
  %v1481 = vpop.f32.mrb[0].mxu0
  %v1482 = vadd.f32 %v1112, %v1481
  %v1483 = vpop.f32.mrb[0].mxu0
  %v1484 = vpop.f32.mrb[0].mxu0
  %1485 = vdwg.mxu0
  %1486 = vmatprep.subr.bf16.mxu0 %v1320
  %1487 = vmatpush1.bf16.msra.mxu0 %v1319
  %1488 = vmatprep.subr.bf16.mxu0 %v1324
  %1489 = vmatpush1.bf16.msra.mxu0 %v1323
  %1490 = vmatprep.subr.bf16.mxu0 %v1328
  %1491 = vmatpush1.bf16.msra.mxu0 %v1327
  %1492 = vmatprep.subr.bf16.mxu0 %v1332
  %1493 = vmatpush1.bf16.msra.mxu0 %v1331
  %1494 = vmatprep.subr.bf16.mxu0 %v1336
  %1495 = vmatpush1.bf16.msra.mxu0 %v1335
  %1496 = vmatprep.subr.bf16.mxu0 %v1340
  %1497 = vmatpush1.bf16.msra.mxu0 %v1339
  %1498 = vmatprep.subr.bf16.mxu0 %v1344
  %1499 = vmatpush1.bf16.msra.mxu0 %v1343
  %1500 = vmatprep.subr.bf16.mxu0 %v1348
  %1501 = vmatpush1.bf16.msra.mxu0 %v1347
  %1502 = vmatprep.subr.bf16.mxu0 %v1352
  %1503 = vmatpush1.bf16.msra.mxu0 %v1351
  %1504 = vmatprep.subr.bf16.mxu0 %v1356
  %1505 = vmatpush1.bf16.msra.mxu0 %v1355
  %1506 = vmatprep.subr.bf16.mxu0 %v1360
  %1507 = vmatpush1.bf16.msra.mxu0 %v1359
  %1508 = vmatprep.subr.bf16.mxu0 %v1364
  %1509 = vmatpush1.bf16.msra.mxu0 %v1363
  %1510 = vmatprep.subr.bf16.mxu0 %v1368
  %1511 = vmatpush1.bf16.msra.mxu0 %v1367
  %1512 = vmatprep.subr.bf16.mxu0 %v1372
  %1513 = vmatpush1.bf16.msra.mxu0 %v1371
  %1514 = vmatprep.subr.bf16.mxu0 %v1376
  %1515 = vmatpush1.bf16.msra.mxu0 %v1375
  %1516 = vmatprep.subr.bf16.mxu0 %v1380
  %1517 = vmatpush1.bf16.msra.mxu0 %v1379
  %1518 = vmatprep.mubr.bf16.mxu0 %v1038
  %1519 = vmatmul.mubr.bf16.gmra.mrb[0].mxu0 %v1037
  %v1520 = vpop.f32.mrb[0].mxu0
  %v1521 = vadd.f32 %v1116, %v1520
  %v1522 = vpop.f32.mrb[0].mxu0
  %v1523 = vadd.f32 %v1120, %v1522
  %v1524 = vpop.f32.mrb[0].mxu0
  %v1525 = vpop.f32.mrb[0].mxu0
  %1526 = vdwg.mxu0
  %v1527 = vmax.f32 %v1480, 0.0
  %v1528 = vmax.f32 %v1482, 0.0
  %v1529 = vmax.f32 %v1521, 0.0
  %v1530 = vmax.f32 %v1523, 0.0
  %v1531 = vpack.c.bf16 %v1527, %v1527
  %v1532 = vpack.c.bf16 %v1528, %v1528
  %v1533 = vpack.c.bf16 %v1529, %v1529
  %v1534 = vpack.c.bf16 %v1530, %v1530
  %v1535 = vld [vmem:[%s6] sm:$0xf]
  %v1536 = vld [vmem:[%s6 + $0x4] sm:$0xf]
  %v1537 = vld [vmem:[%s6 + $0x8] sm:$0xf]
  %v1538 = vld [vmem:[%s6 + $0xc] sm:$0xf]
  %v1539 = vld [vmem:[%s6 + $0x10] sm:$0xf]
  %v1540 = vld [vmem:[%s6 + $0x14] sm:$0xf]
  %v1541 = vld [vmem:[%s6 + $0x18] sm:$0xf]
  %v1542 = vld [vmem:[%s6 + $0x1c] sm:$0xf]
  %v1543 = vld [vmem:[%s6 + $0x20] sm:$0xf]
  %v1544 = vld [vmem:[%s6 + $0x24] sm:$0xf]
  %v1545 = vld [vmem:[%s6 + $0x28] sm:$0xf]
  %v1546 = vld [vmem:[%s6 + $0x2c] sm:$0xf]
  %v1547 = vld [vmem:[%s6 + $0x30] sm:$0xf]
  %v1548 = vld [vmem:[%s6 + $0x34] sm:$0xf]
  %v1549 = vld [vmem:[%s6 + $0x38] sm:$0xf]
  %v1550 = vld [vmem:[%s6 + $0x3c] sm:$0xf]
  %v1551 = vld [vmem:[%s6 + $0x40] sm:$0xf]
  %v1552 = vld [vmem:[%s6 + $0x44] sm:$0xf]
  %v1553 = vld [vmem:[%s6 + $0x48] sm:$0xf]
  %v1554 = vld [vmem:[%s6 + $0x4c] sm:$0xf]
  %v1555 = vld [vmem:[%s6 + $0x50] sm:$0xf]
  %v1556 = vld [vmem:[%s6 + $0x54] sm:$0xf]
  %v1557 = vld [vmem:[%s6 + $0x58] sm:$0xf]
  %v1558 = vld [vmem:[%s6 + $0x5c] sm:$0xf]
  %v1559 = vld [vmem:[%s6 + $0x60] sm:$0xf]
  %v1560 = vld [vmem:[%s6 + $0x64] sm:$0xf]
  %v1561 = vld [vmem:[%s6 + $0x68] sm:$0xf]
  %v1562 = vld [vmem:[%s6 + $0x6c] sm:$0xf]
  %v1563 = vld [vmem:[%s6 + $0x70] sm:$0xf]
  %v1564 = vld [vmem:[%s6 + $0x74] sm:$0xf]
  %v1565 = vld [vmem:[%s6 + $0x78] sm:$0xf]
  %v1566 = vld [vmem:[%s6 + $0x7c] sm:$0xf]
  %v1567 = vld [vmem:[%s6 + $0x80] sm:$0xf]
  %v1568 = vld [vmem:[%s6 + $0x84] sm:$0xf]
  %v1569 = vld [vmem:[%s6 + $0x88] sm:$0xf]
  %v1570 = vld [vmem:[%s6 + $0x8c] sm:$0xf]
  %v1571 = vld [vmem:[%s6 + $0x90] sm:$0xf]
  %v1572 = vld [vmem:[%s6 + $0x94] sm:$0xf]
  %v1573 = vld [vmem:[%s6 + $0x98] sm:$0xf]
  %v1574 = vld [vmem:[%s6 + $0x9c] sm:$0xf]
  %v1575 = vld [vmem:[%s6 + $0xa0] sm:$0xf]
  %v1576 = vld [vmem:[%s6 + $0xa4] sm:$0xf]
  %v1577 = vld [vmem:[%s6 + $0xa8] sm:$0xf]
  %v1578 = vld [vmem:[%s6 + $0xac] sm:$0xf]
  %v1579 = vld [vmem:[%s6 + $0xb0] sm:$0xf]
  %v1580 = vld [vmem:[%s6 + $0xb4] sm:$0xf]
  %v1581 = vld [vmem:[%s6 + $0xb8] sm:$0xf]
  %v1582 = vld [vmem:[%s6 + $0xbc] sm:$0xf]
  %v1583 = vld [vmem:[%s6 + $0xc0] sm:$0xf]
  %v1584 = vld [vmem:[%s6 + $0xc4] sm:$0xf]
  %v1585 = vld [vmem:[%s6 + $0xc8] sm:$0xf]
  %v1586 = vld [vmem:[%s6 + $0xcc] sm:$0xf]
  %v1587 = vld [vmem:[%s6 + $0xd0] sm:$0xf]
  %v1588 = vld [vmem:[%s6 + $0xd4] sm:$0xf]
  %v1589 = vld [vmem:[%s6 + $0xd8] sm:$0xf]
  %v1590 = vld [vmem:[%s6 + $0xdc] sm:$0xf]
  %v1591 = vld [vmem:[%s6 + $0xe0] sm:$0xf]
  %v1592 = vld [vmem:[%s6 + $0xe4] sm:$0xf]
  %v1593 = vld [vmem:[%s6 + $0xe8] sm:$0xf]
  %v1594 = vld [vmem:[%s6 + $0xec] sm:$0xf]
  %v1595 = vld [vmem:[%s6 + $0xf0] sm:$0xf]
  %v1596 = vld [vmem:[%s6 + $0xf4] sm:$0xf]
  %v1597 = vld [vmem:[%s6 + $0xf8] sm:$0xf]
  %v1598 = vld [vmem:[%s6 + $0xfc] sm:$0xf]
  %v1599 = vld [vmem:[%s7] sm:$0x1]
  %v1601 = vlaneseq
  %v1602 = vshrl.u32 %v1601, 7
  %v1603 = vsub.s32 0, %v1602
  %v1604 = vrot.slane %v1599, %v1603
  %v1670 = vunpack.c.l.b16 %v1535
  %v1671 = vunpack.c.l.b16 %v1536
  %v1672 = vunpack.c.l.b16 %v1537
  %v1673 = vunpack.c.l.b16 %v1538
  %v1674 = vunpack.c.l.b16 %v1539
  %v1675 = vunpack.c.l.b16 %v1540
  %v1676 = vunpack.c.l.b16 %v1541
  %v1677 = vunpack.c.l.b16 %v1542
  %v1678 = vunpack.c.l.b16 %v1543
  %v1679 = vunpack.c.l.b16 %v1544
  %v1680 = vunpack.c.l.b16 %v1545
  %v1681 = vunpack.c.l.b16 %v1546
  %v1682 = vunpack.c.l.b16 %v1547
  %v1683 = vunpack.c.l.b16 %v1548
  %v1684 = vunpack.c.l.b16 %v1549
  %v1685 = vunpack.c.l.b16 %v1550
  %v1686 = vunpack.c.l.b16 %v1551
  %v1687 = vunpack.c.l.b16 %v1552
  %v1688 = vunpack.c.l.b16 %v1553
  %v1689 = vunpack.c.l.b16 %v1554
  %v1690 = vunpack.c.l.b16 %v1555
  %v1691 = vunpack.c.l.b16 %v1556
  %v1692 = vunpack.c.l.b16 %v1557
  %v1693 = vunpack.c.l.b16 %v1558
  %v1694 = vunpack.c.l.b16 %v1559
  %v1695 = vunpack.c.l.b16 %v1560
  %v1696 = vunpack.c.l.b16 %v1561
  %v1697 = vunpack.c.l.b16 %v1562
  %v1698 = vunpack.c.l.b16 %v1563
  %v1699 = vunpack.c.l.b16 %v1564
  %v1700 = vunpack.c.l.b16 %v1565
  %v1701 = vunpack.c.l.b16 %v1566
  %v1702 = vunpack.c.l.b16 %v1567
  %v1703 = vunpack.c.l.b16 %v1568
  %v1704 = vunpack.c.l.b16 %v1569
  %v1705 = vunpack.c.l.b16 %v1570
  %v1706 = vunpack.c.l.b16 %v1571
  %v1707 = vunpack.c.l.b16 %v1572
  %v1708 = vunpack.c.l.b16 %v1573
  %v1709 = vunpack.c.l.b16 %v1574
  %v1710 = vunpack.c.l.b16 %v1575
  %v1711 = vunpack.c.l.b16 %v1576
  %v1712 = vunpack.c.l.b16 %v1577
  %v1713 = vunpack.c.l.b16 %v1578
  %v1714 = vunpack.c.l.b16 %v1579
  %v1715 = vunpack.c.l.b16 %v1580
  %v1716 = vunpack.c.l.b16 %v1581
  %v1717 = vunpack.c.l.b16 %v1582
  %v1718 = vunpack.c.l.b16 %v1583
  %v1719 = vunpack.c.l.b16 %v1584
  %v1720 = vunpack.c.l.b16 %v1585
  %v1721 = vunpack.c.l.b16 %v1586
  %v1722 = vunpack.c.l.b16 %v1587
  %v1723 = vunpack.c.l.b16 %v1588
  %v1724 = vunpack.c.l.b16 %v1589
  %v1725 = vunpack.c.l.b16 %v1590
  %v1726 = vunpack.c.l.b16 %v1591
  %v1727 = vunpack.c.l.b16 %v1592
  %v1728 = vunpack.c.l.b16 %v1593
  %v1729 = vunpack.c.l.b16 %v1594
  %v1730 = vunpack.c.l.b16 %v1595
  %v1731 = vunpack.c.l.b16 %v1596
  %v1732 = vunpack.c.l.b16 %v1597
  %v1733 = vunpack.c.l.b16 %v1598
  %v1734 = vpack.c.b16 %v1671, %v1670
  %v1735 = vpack.c.b16 %v1673, %v1672
  %v1736 = vpack.c.b16 %v1675, %v1674
  %v1737 = vpack.c.b16 %v1677, %v1676
  %v1738 = vpack.c.b16 %v1679, %v1678
  %v1739 = vpack.c.b16 %v1681, %v1680
  %v1740 = vpack.c.b16 %v1683, %v1682
  %v1741 = vpack.c.b16 %v1685, %v1684
  %v1742 = vpack.c.b16 %v1687, %v1686
  %v1743 = vpack.c.b16 %v1689, %v1688
  %v1744 = vpack.c.b16 %v1691, %v1690
  %v1745 = vpack.c.b16 %v1693, %v1692
  %v1746 = vpack.c.b16 %v1695, %v1694
  %v1747 = vpack.c.b16 %v1697, %v1696
  %v1748 = vpack.c.b16 %v1699, %v1698
  %v1749 = vpack.c.b16 %v1701, %v1700
  %v1750 = vpack.c.b16 %v1703, %v1702
  %v1751 = vpack.c.b16 %v1705, %v1704
  %v1752 = vpack.c.b16 %v1707, %v1706
  %v1753 = vpack.c.b16 %v1709, %v1708
  %v1754 = vpack.c.b16 %v1711, %v1710
  %v1755 = vpack.c.b16 %v1713, %v1712
  %v1756 = vpack.c.b16 %v1715, %v1714
  %v1757 = vpack.c.b16 %v1717, %v1716
  %v1758 = vpack.c.b16 %v1719, %v1718
  %v1759 = vpack.c.b16 %v1721, %v1720
  %v1760 = vpack.c.b16 %v1723, %v1722
  %v1761 = vpack.c.b16 %v1725, %v1724
  %v1762 = vpack.c.b16 %v1727, %v1726
  %v1763 = vpack.c.b16 %v1729, %v1728
  %v1764 = vpack.c.b16 %v1731, %v1730
  %v1765 = vpack.c.b16 %v1733, %v1732
  %1798 = vmatprep.subr.bf16.mxu0 0
  %1799 = vmatpush1.bf16.msra.mxu0 %v1734
  %1800 = vmatprep.subr.bf16.mxu0 0
  %1801 = vmatpush1.bf16.msra.mxu0 %v1735
  %1802 = vmatprep.subr.bf16.mxu0 0
  %1803 = vmatpush1.bf16.msra.mxu0 %v1736
  %1804 = vmatprep.subr.bf16.mxu0 0
  %1805 = vmatpush1.bf16.msra.mxu0 %v1737
  %1806 = vmatprep.subr.bf16.mxu0 0
  %1807 = vmatpush1.bf16.msra.mxu0 %v1738
  %1808 = vmatprep.subr.bf16.mxu0 0
  %1809 = vmatpush1.bf16.msra.mxu0 %v1739
  %1810 = vmatprep.subr.bf16.mxu0 0
  %1811 = vmatpush1.bf16.msra.mxu0 %v1740
  %1812 = vmatprep.subr.bf16.mxu0 0
  %1813 = vmatpush1.bf16.msra.mxu0 %v1741
  %1814 = vmatprep.subr.bf16.mxu0 0
  %1815 = vmatpush1.bf16.msra.mxu0 %v1742
  %1816 = vmatprep.subr.bf16.mxu0 0
  %1817 = vmatpush1.bf16.msra.mxu0 %v1743
  %1818 = vmatprep.subr.bf16.mxu0 0
  %1819 = vmatpush1.bf16.msra.mxu0 %v1744
  %1820 = vmatprep.subr.bf16.mxu0 0
  %1821 = vmatpush1.bf16.msra.mxu0 %v1745
  %1822 = vmatprep.subr.bf16.mxu0 0
  %1823 = vmatpush1.bf16.msra.mxu0 %v1746
  %1824 = vmatprep.subr.bf16.mxu0 0
  %1825 = vmatpush1.bf16.msra.mxu0 %v1747
  %1826 = vmatprep.subr.bf16.mxu0 0
  %1827 = vmatpush1.bf16.msra.mxu0 %v1748
  %1828 = vmatprep.subr.bf16.mxu0 0
  %1829 = vmatpush1.bf16.msra.mxu0 %v1749
  %1830 = vmatprep.mubr.bf16.mxu0 %v1532
  %1831 = vmatmul.mubr.bf16.gmra.mrb[0].mxu0 %v1531
  %v1832 = vpop.f32.mrb[0].mxu0
  %v1833 = vadd.f32 %v1604, %v1832
  %v1834 = vpop.f32.mrb[0].mxu0
  %v1835 = vpop.f32.mrb[0].mxu0
  %v1836 = vpop.f32.mrb[0].mxu0
  %1837 = vdwg.mxu0
  %1838 = vmatprep.subr.bf16.mxu0 0
  %1839 = vmatpush1.bf16.msra.mxu0 %v1750
  %1840 = vmatprep.subr.bf16.mxu0 0
  %1841 = vmatpush1.bf16.msra.mxu0 %v1751
  %1842 = vmatprep.subr.bf16.mxu0 0
  %1843 = vmatpush1.bf16.msra.mxu0 %v1752
  %1844 = vmatprep.subr.bf16.mxu0 0
  %1845 = vmatpush1.bf16.msra.mxu0 %v1753
  %1846 = vmatprep.subr.bf16.mxu0 0
  %1847 = vmatpush1.bf16.msra.mxu0 %v1754
  %1848 = vmatprep.subr.bf16.mxu0 0
  %1849 = vmatpush1.bf16.msra.mxu0 %v1755
  %1850 = vmatprep.subr.bf16.mxu0 0
  %1851 = vmatpush1.bf16.msra.mxu0 %v1756
  %1852 = vmatprep.subr.bf16.mxu0 0
  %1853 = vmatpush1.bf16.msra.mxu0 %v1757
  %1854 = vmatprep.subr.bf16.mxu0 0
  %1855 = vmatpush1.bf16.msra.mxu0 %v1758
  %1856 = vmatprep.subr.bf16.mxu0 0
  %1857 = vmatpush1.bf16.msra.mxu0 %v1759
  %1858 = vmatprep.subr.bf16.mxu0 0
  %1859 = vmatpush1.bf16.msra.mxu0 %v1760
  %1860 = vmatprep.subr.bf16.mxu0 0
  %1861 = vmatpush1.bf16.msra.mxu0 %v1761
  %1862 = vmatprep.subr.bf16.mxu0 0
  %1863 = vmatpush1.bf16.msra.mxu0 %v1762
  %1864 = vmatprep.subr.bf16.mxu0 0
  %1865 = vmatpush1.bf16.msra.mxu0 %v1763
  %1866 = vmatprep.subr.bf16.mxu0 0
  %1867 = vmatpush1.bf16.msra.mxu0 %v1764
  %1868 = vmatprep.subr.bf16.mxu0 0
  %1869 = vmatpush1.bf16.msra.mxu0 %v1765
  %1870 = vmatprep.mubr.bf16.mxu0 %v1534
  %1871 = vmatmul.mubr.bf16.gmra.mrb[0].mxu0 %v1533
  %v1872 = vpop.f32.mrb[0].mxu0
  %v1873 = vadd.f32 %v1833, %v1872
  %v1874 = vpop.f32.mrb[0].mxu0
  %v1875 = vpop.f32.mrb[0].mxu0
  %v1876 = vpop.f32.mrb[0].mxu0
  %1877 = vdwg.mxu0
  %1878 = vst [vmem:[%s8] sm:$0xff] %v1873
  // Predicated region
  $region34: #{transfer_forward.1} parent=0 // pred_check
    _
  $region35: #{transfer_forward.1} parent=0 // pred_check_branch
    %1880 = sbr.rel (0) target = $region37
  $region36: #{transfer_forward.1} parent=0 // pred_region
    _
  $region37: #{transfer_forward.1} parent=0 // pred_fallthru
    _
  // Predicated region
  $region38: #{transfer_forward.1} parent=0 // pred_check
    _
  $region39: #{transfer_forward.1} parent=0 // pred_check_branch
    %1882 = sbr.rel (0) target = $region41
  $region40: #{transfer_forward.1} parent=0 // pred_region
    _
  $region41: #{transfer_forward.1} parent=0 // pred_fallthru
    _

</llo_original>
